<compile_context>
chip_gen: v5e
topology: v5e:2x2
jax: 0.10.0
libtpu: 0.0.40
codegen_flags: <defaults>
</compile_context>

<pallas_src>
import math
import numpy as np
import jax
import jax.numpy as jnp
from jax.experimental import pallas as pl
from jax.experimental.pallas import tpu as pltpu

# ----------------------------- configuration --------------------------------
LAYERS = 3
BLOCKS = 2
DIL_CH = 16          # dilation_channels
RES_CH = 16          # residual_channels
SKIP_CH = 32         # skip_channels
END_CH = 32          # end_channels
CLASSES = 32         # classes (input channel count)
OUTPUT_LENGTH = 8
KERNEL_SIZE = 2
N_BATCH = 2
L_IN = 24
LANES = 128          # fixed lane width of every in-kernel activation slab


def build_dilations():
    dilations = []
    init_dilation = 1
    for _b in range(BLOCKS):
        new_dilation = 1
        for _i in range(LAYERS):
            dilations.append((new_dilation, init_dilation))
            init_dilation = new_dilation
            new_dilation *= 2
    return dilations


DILATIONS = build_dilations()
N_LAYERS = len(DILATIONS)


def build_layer_plan(n0, l0):
    """Static per-layer geometry of the flattened (time*batch) axis.

    Mirrors the integer math of the PyTorch `dilate`.  Returns (n_d, m) per
    layer: n_d = batch size of the dilated view (== flat shift between the two
    conv taps), m = live flat width of the layer output."""
    plan = []
    n, l = n0, l0
    for dilation, init_dilation in DILATIONS:
        factor = dilation / init_dilation
        if factor == 1:
            l_d, n_d = l, n
        else:
            new_l = int(np.ceil(l / factor) * factor)   # pad at start to new_l
            l_d = int(math.ceil(new_l * init_dilation / dilation))
            n_d = int(math.ceil(n * dilation / init_dilation))
        f_d = l_d * n_d
        m = f_d - n_d                                   # output live width
        assert f_d <= LANES, (f_d, LANES)
        plan.append((n_d, m))
        n, l = n_d, l_d - 1
    return plan


PLAN = build_layer_plan(N_BATCH, L_IN)

# --------------------- packed-weight slab row layout -------------------------
# One lane-dense bf16 slab holds every weight; lane width = widest contraction
# dim (32); smaller-K weights are left-aligned with zero lane padding.
ROW_START = 0
ROW_WFG = ROW_START + RES_CH                           # 6x (32, 32) blocks
ROW_WSR = ROW_WFG + N_LAYERS * 2 * DIL_CH              # 6x (48, 16) blocks
ROW_E1W = ROW_WSR + N_LAYERS * (SKIP_CH + RES_CH)      # (32, 32)
ROW_E2W = ROW_E1W + END_CH                             # (32, 32)
ROW_E1B = ROW_E2W + CLASSES                            # (32, 1) in lane 0
ROW_E2B = ROW_E1B + END_CH                             # (32, 1) in lane 0
W_ROWS = ROW_E2B + CLASSES
W_LANES = 2 * RES_CH                                   # 32
assert W_LANES == max(CLASSES, 2 * RES_CH, DIL_CH, SKIP_CH, END_CH)


# ------------------------------ fused kernel ---------------------------------
def _wavenet_kernel(x_ref, w_ref, out_ref):
    f32, bf16 = jnp.float32, jnp.bfloat16
    col = jax.lax.broadcasted_iota(jnp.int32, (RES_CH, LANES), 1)

    # start_conv (1x1, no bias): (RES_CH, CLASSES) @ (CLASSES, LANES), bf16 MXU.
    x = jnp.dot(w_ref[ROW_START:ROW_START + RES_CH, :],
                x_ref[...].astype(bf16), preferred_element_type=f32)
    skip = jnp.zeros((SKIP_CH, LANES), f32)

    # all BLOCKS*LAYERS gated layers, fully unrolled (static shapes).
    for i, (n_d, m) in enumerate(PLAN):
        live = col >= (LANES - m)
        # r0: "previous" conv tap = live data shifted right by n_d columns.
        #     pltpu.roll is a static lane rotation on the XLU (jnp.roll
        #     semantics: out[:, j] = x[:, j - n_d]); the `live` mask zeroes
        #     both the wrapped-around columns and the dead prefix, and the
        #     zero prefix of x supplies dilate's start padding.
        r0 = jnp.where(live, pltpu.roll(x, shift=n_d, axis=1), 0.0)
        # r1: "current" conv tap = live suffix of x, dead prefix zeroed so the
        #     residual output keeps zeros left of its live region.
        r1 = jnp.where(live, x, 0.0)

        # filter + gate conv in one K = 2*RES_CH bf16 MXU push (f32 accum).
        r01 = jnp.concatenate([r0, r1], axis=0).astype(bf16)   # (2*RES_CH, LANES)
        rw = ROW_WFG + i * 2 * DIL_CH
        fg = jnp.dot(w_ref[rw:rw + 2 * DIL_CH, :], r01, preferred_element_type=f32)
        gated = jnp.tanh(fg[:DIL_CH, :]) * jax.nn.sigmoid(fg[DIL_CH:, :])  # f32

        # skip conv + residual conv in one stacked bf16 matmul (f32 accum).
        rw = ROW_WSR + i * (SKIP_CH + RES_CH)
        sr = jnp.dot(w_ref[rw:rw + SKIP_CH + RES_CH, :DIL_CH],
                     gated.astype(bf16), preferred_element_type=f32)
        skip = skip + sr[:SKIP_CH, :]          # suffix-aligned skip accumulation
        x = sr[SKIP_CH:, :] + r1               # residual conv + residual tail

    # head: relu -> end_conv_1 (+bias) -> relu -> end_conv_2 (+bias)
    h = jnp.maximum(skip, 0.0)
    h = (jnp.dot(w_ref[ROW_E1W:ROW_E1W + END_CH, :], h.astype(bf16),
                 preferred_element_type=f32)
         + w_ref[ROW_E1B:ROW_E1B + END_CH, 0:1].astype(f32))
    h = jnp.maximum(h, 0.0)
    out_ref[...] = (jnp.dot(w_ref[ROW_E2W:ROW_E2W + CLASSES, :], h.astype(bf16),
                            preferred_element_type=f32)
                    + w_ref[ROW_E2B:ROW_E2B + CLASSES, 0:1].astype(f32))


# ----------------------- one-time parameter packing --------------------------
def pack_params(params):
    """Pack every weight into one lane-dense bf16 slab (single DMA)."""
    W = np.zeros((W_ROWS, W_LANES), np.float32)
    W[ROW_START:ROW_START + RES_CH, :CLASSES] = np.asarray(params["start_w"])
    for i in range(N_LAYERS):
        r = ROW_WFG + i * 2 * DIL_CH                     # [[wf0 wf1],[wg0 wg1]]
        W[r:r + DIL_CH, :RES_CH] = np.asarray(params["wf0"][i])
        W[r:r + DIL_CH, RES_CH:2 * RES_CH] = np.asarray(params["wf1"][i])
        W[r + DIL_CH:r + 2 * DIL_CH, :RES_CH] = np.asarray(params["wg0"][i])
        W[r + DIL_CH:r + 2 * DIL_CH, RES_CH:2 * RES_CH] = np.asarray(params["wg1"][i])
        r = ROW_WSR + i * (SKIP_CH + RES_CH)             # [ws; wr], lanes 0:16
        W[r:r + SKIP_CH, :DIL_CH] = np.asarray(params["ws"][i])
        W[r + SKIP_CH:r + SKIP_CH + RES_CH, :DIL_CH] = np.asarray(params["wr"][i])
    W[ROW_E1W:ROW_E1W + END_CH, :SKIP_CH] = np.asarray(params["end1_w"])
    W[ROW_E2W:ROW_E2W + CLASSES, :END_CH] = np.asarray(params["end2_w"])
    W[ROW_E1B:ROW_E1B + END_CH, :1] = np.asarray(params["end1_b"])
    W[ROW_E2B:ROW_E2B + CLASSES, :1] = np.asarray(params["end2_b"])
    return jnp.asarray(W, dtype=jnp.bfloat16)


# ------------------------------ model forward --------------------------------
@jax.jit
def wavenet_forward_pallas(wpack, inp):
    """inp: (N, CLASSES, L) float32 -> (N, CLASSES, OUTPUT_LENGTH)."""
    n0, _, l0 = inp.shape
    assert (n0, l0) == (N_BATCH, L_IN), (n0, l0)
    f0 = n0 * l0

    # channel-major flat layout (C, t*n + b), right-aligned in LANES columns.
    x2 = jnp.transpose(inp, (1, 2, 0)).reshape(CLASSES, f0)
    x0 = jnp.pad(x2, ((0, 0), (LANES - f0, 0)))

    vmem = pl.BlockSpec(memory_space=pltpu.MemorySpace.VMEM)
    out_full = pl.pallas_call(
        _wavenet_kernel,
        out_shape=jax.ShapeDtypeStruct((CLASSES, LANES), jnp.float32),
        in_specs=[vmem, vmem],
        out_specs=vmem,
        compiler_params=pltpu.CompilerParams(
            # allow the transpose/pad producer of x0 to fuse into the call
            allow_input_fusion=[True, False]),
    )(x0, wpack)

    m_out = OUTPUT_LENGTH * n0
    out = out_full[:, LANES - m_out:].reshape(CLASSES, OUTPUT_LENGTH, n0)
    return jnp.transpose(out, (2, 0, 1))


# --------------------------- pure-JAX reference ------------------------------
def dilate_jax(x, dilation, init_dilation=1, pad_start=True):
    """Exact mirror of the PyTorch `dilate` (pad + permute/view/permute)."""
    n, c, l = x.shape
    dilation_factor = dilation / init_dilation
    if dilation_factor == 1:
        return x
    new_l = int(np.ceil(l / dilation_factor) * dilation_factor)
    if new_l != l:
        num_pad = new_l - l
        if pad_start:
            x = jnp.pad(x, ((0, 0), (0, 0), (num_pad, 0)))
        else:
            x = jnp.pad(x, ((0, 0), (0, 0), (0, num_pad)))
        l = new_l
    l_new = int(math.ceil(l * init_dilation / dilation))
    n_new = int(math.ceil(n * dilation / init_dilation))
    x = jnp.transpose(x, (1, 2, 0))          # (c, l, n)
    x = x.reshape(c, l_new, n_new)
    x = jnp.transpose(x, (2, 0, 1))          # (n_new, c, l_new)
    return x


def _conv1x1_ref(x, w):
    return jnp.einsum("oc,ncl->nol", w, x, precision=jax.lax.Precision.HIGHEST)


def wavenet_forward_ref(params, inp):
    x = _conv1x1_ref(inp, params["start_w"])
    skip = None
    for i, (dilation, init_dilation) in enumerate(DILATIONS):
        residual = dilate_jax(x, dilation, init_dilation)
        f = (_conv1x1_ref(residual[:, :, :-1], params["wf0"][i])
             + _conv1x1_ref(residual[:, :, 1:], params["wf1"][i]))
        g = (_conv1x1_ref(residual[:, :, :-1], params["wg0"][i])
             + _conv1x1_ref(residual[:, :, 1:], params["wg1"][i]))
        x = jnp.tanh(f) * jax.nn.sigmoid(g)
        s = x
        if s.shape[2] != 1:
            s = dilate_jax(s, 1, init_dilation=dilation)
        s = _conv1x1_ref(s, params["ws"][i])
        if skip is None:
            skip = s
        else:
            skip = skip[:, :, -s.shape[2]:] + s
        x = _conv1x1_ref(x, params["wr"][i]) + residual[:, :, KERNEL_SIZE - 1:]
    h = jax.nn.relu(skip)
    h = jax.nn.relu(_conv1x1_ref(h, params["end1_w"]) + params["end1_b"][None, :, :])
    out = _conv1x1_ref(h, params["end2_w"]) + params["end2_b"][None, :, :]
    return out[:, :, -OUTPUT_LENGTH:]


# ------------------------------ params / main --------------------------------
def init_params(key):
    n_layers = BLOCKS * LAYERS
    keys = jax.random.split(key, 5 + 4 * n_layers)
    k = iter(keys)
    p = {
        "start_w": 0.1 * jax.random.normal(next(k), (RES_CH, CLASSES), jnp.float32),
        "wf0": [], "wf1": [], "wg0": [], "wg1": [], "ws": [], "wr": [],
    }
    for _ in range(n_layers):
        wf = 0.1 * jax.random.normal(next(k), (DIL_CH, RES_CH, KERNEL_SIZE), jnp.float32)
        wg = 0.1 * jax.random.normal(next(k), (DIL_CH, RES_CH, KERNEL_SIZE), jnp.float32)
        p["wf0"].append(wf[:, :, 0]); p["wf1"].append(wf[:, :, 1])
        p["wg0"].append(wg[:, :, 0]); p["wg1"].append(wg[:, :, 1])
        p["ws"].append(0.1 * jax.random.normal(next(k), (SKIP_CH, DIL_CH), jnp.float32))
        p["wr"].append(0.1 * jax.random.normal(next(k), (RES_CH, DIL_CH), jnp.float32))
    p["end1_w"] = 0.1 * jax.random.normal(next(k), (END_CH, SKIP_CH), jnp.float32)
    p["end1_b"] = 0.05 * jax.random.normal(next(k), (END_CH, 1), jnp.float32)
    p["end2_w"] = 0.1 * jax.random.normal(next(k), (CLASSES, END_CH), jnp.float32)
    p["end2_b"] = 0.05 * jax.random.normal(next(k), (CLASSES, 1), jnp.float32)
    return p


if __name__ == "__main__":
    key = jax.random.PRNGKey(0)
    pkey, xkey = jax.random.split(key)
    params = init_params(pkey)
    inp = 0.5 * jax.random.normal(xkey, (N_BATCH, CLASSES, L_IN), jnp.float32)

    wpack = pack_params(params)
    out = jax.block_until_ready(wavenet_forward_pallas(wpack, inp))

    ref = jax.block_until_ready(wavenet_forward_ref(params, inp))
    assert out.shape == (N_BATCH, CLASSES, OUTPUT_LENGTH), out.shape
    np.testing.assert_allclose(np.asarray(out), np.asarray(ref), rtol=2e-2, atol=2e-2)

    print("KERNEL_OK")
</pallas_src>

<mosaic_0001>
module attributes {stable_mosaic.version = 11 : i64} {
  func.func @_wavenet_kernel(%arg0: memref<32x128xf32, #tpu.memory_space<vmem>>, %arg1: memref<624x32xbf16, #tpu.memory_space<vmem>>, %arg2: memref<32x128xf32, #tpu.memory_space<vmem>>) attributes {dimension_semantics = [], scalar_prefetch = 0 : i64, scratch_operands = 0 : i64, tpu.core_type = #tpu.core_type<tc>} {
    %0 = tpu.iota {dimensions = array<i32: 1>} : vector<16x128xi32>
    %c0 = arith.constant 0 : index
    %c0_0 = arith.constant 0 : index
    %1 = vector.load %arg1[%c0, %c0_0] : memref<624x32xbf16, #tpu.memory_space<vmem>>, vector<16x32xbf16>
    %c0_1 = arith.constant 0 : index
    %c0_2 = arith.constant 0 : index
    %2 = vector.load %arg0[%c0_1, %c0_2] : memref<32x128xf32, #tpu.memory_space<vmem>>, vector<32x128xf32>
    %3 = arith.truncf %2 : vector<32x128xf32> to vector<32x128xbf16>
    %cst = arith.constant dense<0.000000e+00> : vector<16x128xf32>
    %4 = tpu.matmul %1, %3, %cst {dimension_numbers = #tpu.dot_dimension_numbers<[1], [0], [0], [1], [0, 0, 1, 1], [], []>} : vector<16x32xbf16>, vector<32x128xbf16>, vector<16x128xf32> -> vector<16x128xf32>
    %cst_3 = arith.constant 0.000000e+00 : f32
    %5 = vector.broadcast %cst_3 : f32 to vector<32x128xf32>
    %c82_i32 = arith.constant 82 : i32
    %6 = vector.broadcast %c82_i32 : i32 to vector<16x128xi32>
    %7 = arith.cmpi sge, %0, %6 : vector<16x128xi32>
    %c2_i32 = arith.constant 2 : i32
    %8 = tpu.dynamic_rotate %4 by %c2_i32 dim 1 : vector<16x128xf32>, i32 -> vector<16x128xf32>
    %cst_4 = arith.constant 0.000000e+00 : f32
    %9 = vector.broadcast %cst_4 : f32 to vector<16x128xf32>
    %10 = arith.select %7, %8, %9 : vector<16x128xi1>, vector<16x128xf32>
    %cst_5 = arith.constant 0.000000e+00 : f32
    %11 = vector.broadcast %cst_5 : f32 to vector<16x128xf32>
    %12 = arith.select %7, %4, %11 : vector<16x128xi1>, vector<16x128xf32>
    %13 = tpu.concatenate %10, %12 in 0 : vector<16x128xf32>, vector<16x128xf32> -> vector<32x128xf32>
    %14 = arith.truncf %13 : vector<32x128xf32> to vector<32x128xbf16>
    %c16 = arith.constant 16 : index
    %c0_6 = arith.constant 0 : index
    %15 = vector.load %arg1[%c16, %c0_6] : memref<624x32xbf16, #tpu.memory_space<vmem>>, vector<32x32xbf16>
    %cst_7 = arith.constant dense<0.000000e+00> : vector<32x128xf32>
    %16 = tpu.matmul %15, %14, %cst_7 {dimension_numbers = #tpu.dot_dimension_numbers<[1], [0], [0], [1], [0, 0, 1, 1], [], []>} : vector<32x32xbf16>, vector<32x128xbf16>, vector<32x128xf32> -> vector<32x128xf32>
    %17 = vector.extract_strided_slice %16 {offsets = [0, 0], sizes = [16, 128], strides = [1, 1]} : vector<32x128xf32> to vector<16x128xf32>
    %18 = math.tanh %17 : vector<16x128xf32>
    %19 = vector.extract_strided_slice %16 {offsets = [16, 0], sizes = [16, 128], strides = [1, 1]} : vector<32x128xf32> to vector<16x128xf32>
    %20 = arith.negf %19 : vector<16x128xf32>
    %21 = math.exp %20 : vector<16x128xf32>
    %cst_8 = arith.constant 1.000000e+00 : f32
    %22 = vector.broadcast %cst_8 : f32 to vector<16x128xf32>
    %23 = arith.addf %22, %21 : vector<16x128xf32>
    %24 = arith.divf %22, %23 : vector<16x128xf32>
    %25 = arith.mulf %18, %24 : vector<16x128xf32>
    %c208 = arith.constant 208 : index
    %c0_9 = arith.constant 0 : index
    %26 = vector.load %arg1[%c208, %c0_9] : memref<624x32xbf16, #tpu.memory_space<vmem>>, vector<48x16xbf16>
    %27 = arith.truncf %25 : vector<16x128xf32> to vector<16x128xbf16>
    %cst_10 = arith.constant dense<0.000000e+00> : vector<48x128xf32>
    %28 = tpu.matmul %26, %27, %cst_10 {dimension_numbers = #tpu.dot_dimension_numbers<[1], [0], [0], [1], [0, 0, 1, 1], [], []>} : vector<48x16xbf16>, vector<16x128xbf16>, vector<48x128xf32> -> vector<48x128xf32>
    %29 = vector.extract_strided_slice %28 {offsets = [0, 0], sizes = [32, 128], strides = [1, 1]} : vector<48x128xf32> to vector<32x128xf32>
    %30 = arith.addf %5, %29 : vector<32x128xf32>
    %31 = vector.extract_strided_slice %28 {offsets = [32, 0], sizes = [16, 128], strides = [1, 1]} : vector<48x128xf32> to vector<16x128xf32>
    %32 = arith.addf %31, %12 : vector<16x128xf32>
    %c84_i32 = arith.constant 84 : i32
    %33 = vector.broadcast %c84_i32 : i32 to vector<16x128xi32>
    %34 = arith.cmpi sge, %0, %33 : vector<16x128xi32>
    %c4_i32 = arith.constant 4 : i32
    %35 = tpu.dynamic_rotate %32 by %c4_i32 dim 1 : vector<16x128xf32>, i32 -> vector<16x128xf32>
    %cst_11 = arith.constant 0.000000e+00 : f32
    %36 = vector.broadcast %cst_11 : f32 to vector<16x128xf32>
    %37 = arith.select %34, %35, %36 : vector<16x128xi1>, vector<16x128xf32>
    %cst_12 = arith.constant 0.000000e+00 : f32
    %38 = vector.broadcast %cst_12 : f32 to vector<16x128xf32>
    %39 = arith.select %34, %32, %38 : vector<16x128xi1>, vector<16x128xf32>
    %40 = tpu.concatenate %37, %39 in 0 : vector<16x128xf32>, vector<16x128xf32> -> vector<32x128xf32>
    %41 = arith.truncf %40 : vector<32x128xf32> to vector<32x128xbf16>
    %c48 = arith.constant 48 : index
    %c0_13 = arith.constant 0 : index
    %42 = vector.load %arg1[%c48, %c0_13] : memref<624x32xbf16, #tpu.memory_space<vmem>>, vector<32x32xbf16>
    %cst_14 = arith.constant dense<0.000000e+00> : vector<32x128xf32>
    %43 = tpu.matmul %42, %41, %cst_14 {dimension_numbers = #tpu.dot_dimension_numbers<[1], [0], [0], [1], [0, 0, 1, 1], [], []>} : vector<32x32xbf16>, vector<32x128xbf16>, vector<32x128xf32> -> vector<32x128xf32>
    %44 = vector.extract_strided_slice %43 {offsets = [0, 0], sizes = [16, 128], strides = [1, 1]} : vector<32x128xf32> to vector<16x128xf32>
    %45 = math.tanh %44 : vector<16x128xf32>
    %46 = vector.extract_strided_slice %43 {offsets = [16, 0], sizes = [16, 128], strides = [1, 1]} : vector<32x128xf32> to vector<16x128xf32>
    %47 = arith.negf %46 : vector<16x128xf32>
    %48 = math.exp %47 : vector<16x128xf32>
    %cst_15 = arith.constant 1.000000e+00 : f32
    %49 = vector.broadcast %cst_15 : f32 to vector<16x128xf32>
    %50 = arith.addf %49, %48 : vector<16x128xf32>
    %51 = arith.divf %49, %50 : vector<16x128xf32>
    %52 = arith.mulf %45, %51 : vector<16x128xf32>
    %c256 = arith.constant 256 : index
    %c0_16 = arith.constant 0 : index
    %53 = vector.load %arg1[%c256, %c0_16] : memref<624x32xbf16, #tpu.memory_space<vmem>>, vector<48x16xbf16>
    %54 = arith.truncf %52 : vector<16x128xf32> to vector<16x128xbf16>
    %cst_17 = arith.constant dense<0.000000e+00> : vector<48x128xf32>
    %55 = tpu.matmul %53, %54, %cst_17 {dimension_numbers = #tpu.dot_dimension_numbers<[1], [0], [0], [1], [0, 0, 1, 1], [], []>} : vector<48x16xbf16>, vector<16x128xbf16>, vector<48x128xf32> -> vector<48x128xf32>
    %56 = vector.extract_strided_slice %55 {offsets = [0, 0], sizes = [32, 128], strides = [1, 1]} : vector<48x128xf32> to vector<32x128xf32>
    %57 = arith.addf %30, %56 : vector<32x128xf32>
    %58 = vector.extract_strided_slice %55 {offsets = [32, 0], sizes = [16, 128], strides = [1, 1]} : vector<48x128xf32> to vector<16x128xf32>
    %59 = arith.addf %58, %39 : vector<16x128xf32>
    %c88_i32 = arith.constant 88 : i32
    %60 = vector.broadcast %c88_i32 : i32 to vector<16x128xi32>
    %61 = arith.cmpi sge, %0, %60 : vector<16x128xi32>
    %c8_i32 = arith.constant 8 : i32
    %62 = tpu.dynamic_rotate %59 by %c8_i32 dim 1 : vector<16x128xf32>, i32 -> vector<16x128xf32>
    %cst_18 = arith.constant 0.000000e+00 : f32
    %63 = vector.broadcast %cst_18 : f32 to vector<16x128xf32>
    %64 = arith.select %61, %62, %63 : vector<16x128xi1>, vector<16x128xf32>
    %cst_19 = arith.constant 0.000000e+00 : f32
    %65 = vector.broadcast %cst_19 : f32 to vector<16x128xf32>
    %66 = arith.select %61, %59, %65 : vector<16x128xi1>, vector<16x128xf32>
    %67 = tpu.concatenate %64, %66 in 0 : vector<16x128xf32>, vector<16x128xf32> -> vector<32x128xf32>
    %68 = arith.truncf %67 : vector<32x128xf32> to vector<32x128xbf16>
    %c80 = arith.constant 80 : index
    %c0_20 = arith.constant 0 : index
    %69 = vector.load %arg1[%c80, %c0_20] : memref<624x32xbf16, #tpu.memory_space<vmem>>, vector<32x32xbf16>
    %cst_21 = arith.constant dense<0.000000e+00> : vector<32x128xf32>
    %70 = tpu.matmul %69, %68, %cst_21 {dimension_numbers = #tpu.dot_dimension_numbers<[1], [0], [0], [1], [0, 0, 1, 1], [], []>} : vector<32x32xbf16>, vector<32x128xbf16>, vector<32x128xf32> -> vector<32x128xf32>
    %71 = vector.extract_strided_slice %70 {offsets = [0, 0], sizes = [16, 128], strides = [1, 1]} : vector<32x128xf32> to vector<16x128xf32>
    %72 = math.tanh %71 : vector<16x128xf32>
    %73 = vector.extract_strided_slice %70 {offsets = [16, 0], sizes = [16, 128], strides = [1, 1]} : vector<32x128xf32> to vector<16x128xf32>
    %74 = arith.negf %73 : vector<16x128xf32>
    %75 = math.exp %74 : vector<16x128xf32>
    %cst_22 = arith.constant 1.000000e+00 : f32
    %76 = vector.broadcast %cst_22 : f32 to vector<16x128xf32>
    %77 = arith.addf %76, %75 : vector<16x128xf32>
    %78 = arith.divf %76, %77 : vector<16x128xf32>
    %79 = arith.mulf %72, %78 : vector<16x128xf32>
    %c304 = arith.constant 304 : index
    %c0_23 = arith.constant 0 : index
    %80 = vector.load %arg1[%c304, %c0_23] : memref<624x32xbf16, #tpu.memory_space<vmem>>, vector<48x16xbf16>
    %81 = arith.truncf %79 : vector<16x128xf32> to vector<16x128xbf16>
    %cst_24 = arith.constant dense<0.000000e+00> : vector<48x128xf32>
    %82 = tpu.matmul %80, %81, %cst_24 {dimension_numbers = #tpu.dot_dimension_numbers<[1], [0], [0], [1], [0, 0, 1, 1], [], []>} : vector<48x16xbf16>, vector<16x128xbf16>, vector<48x128xf32> -> vector<48x128xf32>
    %83 = vector.extract_strided_slice %82 {offsets = [0, 0], sizes = [32, 128], strides = [1, 1]} : vector<48x128xf32> to vector<32x128xf32>
    %84 = arith.addf %57, %83 : vector<32x128xf32>
    %85 = vector.extract_strided_slice %82 {offsets = [32, 0], sizes = [16, 128], strides = [1, 1]} : vector<48x128xf32> to vector<16x128xf32>
    %86 = arith.addf %85, %66 : vector<16x128xf32>
    %c90_i32 = arith.constant 90 : i32
    %87 = vector.broadcast %c90_i32 : i32 to vector<16x128xi32>
    %88 = arith.cmpi sge, %0, %87 : vector<16x128xi32>
    %c2_i32_25 = arith.constant 2 : i32
    %89 = tpu.dynamic_rotate %86 by %c2_i32_25 dim 1 : vector<16x128xf32>, i32 -> vector<16x128xf32>
    %cst_26 = arith.constant 0.000000e+00 : f32
    %90 = vector.broadcast %cst_26 : f32 to vector<16x128xf32>
    %91 = arith.select %88, %89, %90 : vector<16x128xi1>, vector<16x128xf32>
    %cst_27 = arith.constant 0.000000e+00 : f32
    %92 = vector.broadcast %cst_27 : f32 to vector<16x128xf32>
    %93 = arith.select %88, %86, %92 : vector<16x128xi1>, vector<16x128xf32>
    %94 = tpu.concatenate %91, %93 in 0 : vector<16x128xf32>, vector<16x128xf32> -> vector<32x128xf32>
    %95 = arith.truncf %94 : vector<32x128xf32> to vector<32x128xbf16>
    %c112 = arith.constant 112 : index
    %c0_28 = arith.constant 0 : index
    %96 = vector.load %arg1[%c112, %c0_28] : memref<624x32xbf16, #tpu.memory_space<vmem>>, vector<32x32xbf16>
    %cst_29 = arith.constant dense<0.000000e+00> : vector<32x128xf32>
    %97 = tpu.matmul %96, %95, %cst_29 {dimension_numbers = #tpu.dot_dimension_numbers<[1], [0], [0], [1], [0, 0, 1, 1], [], []>} : vector<32x32xbf16>, vector<32x128xbf16>, vector<32x128xf32> -> vector<32x128xf32>
    %98 = vector.extract_strided_slice %97 {offsets = [0, 0], sizes = [16, 128], strides = [1, 1]} : vector<32x128xf32> to vector<16x128xf32>
    %99 = math.tanh %98 : vector<16x128xf32>
    %100 = vector.extract_strided_slice %97 {offsets = [16, 0], sizes = [16, 128], strides = [1, 1]} : vector<32x128xf32> to vector<16x128xf32>
    %101 = arith.negf %100 : vector<16x128xf32>
    %102 = math.exp %101 : vector<16x128xf32>
    %cst_30 = arith.constant 1.000000e+00 : f32
    %103 = vector.broadcast %cst_30 : f32 to vector<16x128xf32>
    %104 = arith.addf %103, %102 : vector<16x128xf32>
    %105 = arith.divf %103, %104 : vector<16x128xf32>
    %106 = arith.mulf %99, %105 : vector<16x128xf32>
    %c352 = arith.constant 352 : index
    %c0_31 = arith.constant 0 : index
    %107 = vector.load %arg1[%c352, %c0_31] : memref<624x32xbf16, #tpu.memory_space<vmem>>, vector<48x16xbf16>
    %108 = arith.truncf %106 : vector<16x128xf32> to vector<16x128xbf16>
    %cst_32 = arith.constant dense<0.000000e+00> : vector<48x128xf32>
    %109 = tpu.matmul %107, %108, %cst_32 {dimension_numbers = #tpu.dot_dimension_numbers<[1], [0], [0], [1], [0, 0, 1, 1], [], []>} : vector<48x16xbf16>, vector<16x128xbf16>, vector<48x128xf32> -> vector<48x128xf32>
    %110 = vector.extract_strided_slice %109 {offsets = [0, 0], sizes = [32, 128], strides = [1, 1]} : vector<48x128xf32> to vector<32x128xf32>
    %111 = arith.addf %84, %110 : vector<32x128xf32>
    %112 = vector.extract_strided_slice %109 {offsets = [32, 0], sizes = [16, 128], strides = [1, 1]} : vector<48x128xf32> to vector<16x128xf32>
    %113 = arith.addf %112, %93 : vector<16x128xf32>
    %c92_i32 = arith.constant 92 : i32
    %114 = vector.broadcast %c92_i32 : i32 to vector<16x128xi32>
    %115 = arith.cmpi sge, %0, %114 : vector<16x128xi32>
    %c4_i32_33 = arith.constant 4 : i32
    %116 = tpu.dynamic_rotate %113 by %c4_i32_33 dim 1 : vector<16x128xf32>, i32 -> vector<16x128xf32>
    %cst_34 = arith.constant 0.000000e+00 : f32
    %117 = vector.broadcast %cst_34 : f32 to vector<16x128xf32>
    %118 = arith.select %115, %116, %117 : vector<16x128xi1>, vector<16x128xf32>
    %cst_35 = arith.constant 0.000000e+00 : f32
    %119 = vector.broadcast %cst_35 : f32 to vector<16x128xf32>
    %120 = arith.select %115, %113, %119 : vector<16x128xi1>, vector<16x128xf32>
    %121 = tpu.concatenate %118, %120 in 0 : vector<16x128xf32>, vector<16x128xf32> -> vector<32x128xf32>
    %122 = arith.truncf %121 : vector<32x128xf32> to vector<32x128xbf16>
    %c144 = arith.constant 144 : index
    %c0_36 = arith.constant 0 : index
    %123 = vector.load %arg1[%c144, %c0_36] : memref<624x32xbf16, #tpu.memory_space<vmem>>, vector<32x32xbf16>
    %cst_37 = arith.constant dense<0.000000e+00> : vector<32x128xf32>
    %124 = tpu.matmul %123, %122, %cst_37 {dimension_numbers = #tpu.dot_dimension_numbers<[1], [0], [0], [1], [0, 0, 1, 1], [], []>} : vector<32x32xbf16>, vector<32x128xbf16>, vector<32x128xf32> -> vector<32x128xf32>
    %125 = vector.extract_strided_slice %124 {offsets = [0, 0], sizes = [16, 128], strides = [1, 1]} : vector<32x128xf32> to vector<16x128xf32>
    %126 = math.tanh %125 : vector<16x128xf32>
    %127 = vector.extract_strided_slice %124 {offsets = [16, 0], sizes = [16, 128], strides = [1, 1]} : vector<32x128xf32> to vector<16x128xf32>
    %128 = arith.negf %127 : vector<16x128xf32>
    %129 = math.exp %128 : vector<16x128xf32>
    %cst_38 = arith.constant 1.000000e+00 : f32
    %130 = vector.broadcast %cst_38 : f32 to vector<16x128xf32>
    %131 = arith.addf %130, %129 : vector<16x128xf32>
    %132 = arith.divf %130, %131 : vector<16x128xf32>
    %133 = arith.mulf %126, %132 : vector<16x128xf32>
    %c400 = arith.constant 400 : index
    %c0_39 = arith.constant 0 : index
    %134 = vector.load %arg1[%c400, %c0_39] : memref<624x32xbf16, #tpu.memory_space<vmem>>, vector<48x16xbf16>
    %135 = arith.truncf %133 : vector<16x128xf32> to vector<16x128xbf16>
    %cst_40 = arith.constant dense<0.000000e+00> : vector<48x128xf32>
    %136 = tpu.matmul %134, %135, %cst_40 {dimension_numbers = #tpu.dot_dimension_numbers<[1], [0], [0], [1], [0, 0, 1, 1], [], []>} : vector<48x16xbf16>, vector<16x128xbf16>, vector<48x128xf32> -> vector<48x128xf32>
    %137 = vector.extract_strided_slice %136 {offsets = [0, 0], sizes = [32, 128], strides = [1, 1]} : vector<48x128xf32> to vector<32x128xf32>
    %138 = arith.addf %111, %137 : vector<32x128xf32>
    %139 = vector.extract_strided_slice %136 {offsets = [32, 0], sizes = [16, 128], strides = [1, 1]} : vector<48x128xf32> to vector<16x128xf32>
    %140 = arith.addf %139, %120 : vector<16x128xf32>
    %c96_i32 = arith.constant 96 : i32
    %141 = vector.broadcast %c96_i32 : i32 to vector<16x128xi32>
    %142 = arith.cmpi sge, %0, %141 : vector<16x128xi32>
    %c8_i32_41 = arith.constant 8 : i32
    %143 = tpu.dynamic_rotate %140 by %c8_i32_41 dim 1 : vector<16x128xf32>, i32 -> vector<16x128xf32>
    %cst_42 = arith.constant 0.000000e+00 : f32
    %144 = vector.broadcast %cst_42 : f32 to vector<16x128xf32>
    %145 = arith.select %142, %143, %144 : vector<16x128xi1>, vector<16x128xf32>
    %cst_43 = arith.constant 0.000000e+00 : f32
    %146 = vector.broadcast %cst_43 : f32 to vector<16x128xf32>
    %147 = arith.select %142, %140, %146 : vector<16x128xi1>, vector<16x128xf32>
    %148 = tpu.concatenate %145, %147 in 0 : vector<16x128xf32>, vector<16x128xf32> -> vector<32x128xf32>
    %149 = arith.truncf %148 : vector<32x128xf32> to vector<32x128xbf16>
    %c176 = arith.constant 176 : index
    %c0_44 = arith.constant 0 : index
    %150 = vector.load %arg1[%c176, %c0_44] : memref<624x32xbf16, #tpu.memory_space<vmem>>, vector<32x32xbf16>
    %cst_45 = arith.constant dense<0.000000e+00> : vector<32x128xf32>
    %151 = tpu.matmul %150, %149, %cst_45 {dimension_numbers = #tpu.dot_dimension_numbers<[1], [0], [0], [1], [0, 0, 1, 1], [], []>} : vector<32x32xbf16>, vector<32x128xbf16>, vector<32x128xf32> -> vector<32x128xf32>
    %152 = vector.extract_strided_slice %151 {offsets = [0, 0], sizes = [16, 128], strides = [1, 1]} : vector<32x128xf32> to vector<16x128xf32>
    %153 = math.tanh %152 : vector<16x128xf32>
    %154 = vector.extract_strided_slice %151 {offsets = [16, 0], sizes = [16, 128], strides = [1, 1]} : vector<32x128xf32> to vector<16x128xf32>
    %155 = arith.negf %154 : vector<16x128xf32>
    %156 = math.exp %155 : vector<16x128xf32>
    %cst_46 = arith.constant 1.000000e+00 : f32
    %157 = vector.broadcast %cst_46 : f32 to vector<16x128xf32>
    %158 = arith.addf %157, %156 : vector<16x128xf32>
    %159 = arith.divf %157, %158 : vector<16x128xf32>
    %160 = arith.mulf %153, %159 : vector<16x128xf32>
    %c448 = arith.constant 448 : index
    %c0_47 = arith.constant 0 : index
    %161 = vector.load %arg1[%c448, %c0_47] : memref<624x32xbf16, #tpu.memory_space<vmem>>, vector<48x16xbf16>
    %162 = arith.truncf %160 : vector<16x128xf32> to vector<16x128xbf16>
    %cst_48 = arith.constant dense<0.000000e+00> : vector<48x128xf32>
    %163 = tpu.matmul %161, %162, %cst_48 {dimension_numbers = #tpu.dot_dimension_numbers<[1], [0], [0], [1], [0, 0, 1, 1], [], []>} : vector<48x16xbf16>, vector<16x128xbf16>, vector<48x128xf32> -> vector<48x128xf32>
    %164 = vector.extract_strided_slice %163 {offsets = [0, 0], sizes = [32, 128], strides = [1, 1]} : vector<48x128xf32> to vector<32x128xf32>
    %165 = arith.addf %138, %164 : vector<32x128xf32>
    %cst_49 = arith.constant 0.000000e+00 : f32
    %166 = vector.broadcast %cst_49 : f32 to vector<32x128xf32>
    %167 = arith.maximumf %165, %166 : vector<32x128xf32>
    %c496 = arith.constant 496 : index
    %c0_50 = arith.constant 0 : index
    %168 = vector.load %arg1[%c496, %c0_50] : memref<624x32xbf16, #tpu.memory_space<vmem>>, vector<32x32xbf16>
    %169 = arith.truncf %167 : vector<32x128xf32> to vector<32x128xbf16>
    %cst_51 = arith.constant dense<0.000000e+00> : vector<32x128xf32>
    %170 = tpu.matmul %168, %169, %cst_51 {dimension_numbers = #tpu.dot_dimension_numbers<[1], [0], [0], [1], [0, 0, 1, 1], [], []>} : vector<32x32xbf16>, vector<32x128xbf16>, vector<32x128xf32> -> vector<32x128xf32>
    %c560 = arith.constant 560 : index
    %c0_52 = arith.constant 0 : index
    %171 = vector.load %arg1[%c560, %c0_52] : memref<624x32xbf16, #tpu.memory_space<vmem>>, vector<32x1xbf16>
    %172 = arith.extf %171 : vector<32x1xbf16> to vector<32x1xf32>
    %173 = vector.broadcast %172 : vector<32x1xf32> to vector<32x128xf32>
    %174 = arith.addf %170, %173 : vector<32x128xf32>
    %cst_53 = arith.constant 0.000000e+00 : f32
    %175 = vector.broadcast %cst_53 : f32 to vector<32x128xf32>
    %176 = arith.maximumf %174, %175 : vector<32x128xf32>
    %c528 = arith.constant 528 : index
    %c0_54 = arith.constant 0 : index
    %177 = vector.load %arg1[%c528, %c0_54] : memref<624x32xbf16, #tpu.memory_space<vmem>>, vector<32x32xbf16>
    %178 = arith.truncf %176 : vector<32x128xf32> to vector<32x128xbf16>
    %cst_55 = arith.constant dense<0.000000e+00> : vector<32x128xf32>
    %179 = tpu.matmul %177, %178, %cst_55 {dimension_numbers = #tpu.dot_dimension_numbers<[1], [0], [0], [1], [0, 0, 1, 1], [], []>} : vector<32x32xbf16>, vector<32x128xbf16>, vector<32x128xf32> -> vector<32x128xf32>
    %c592 = arith.constant 592 : index
    %c0_56 = arith.constant 0 : index
    %180 = vector.load %arg1[%c592, %c0_56] : memref<624x32xbf16, #tpu.memory_space<vmem>>, vector<32x1xbf16>
    %181 = arith.extf %180 : vector<32x1xbf16> to vector<32x1xf32>
    %182 = vector.broadcast %181 : vector<32x1xf32> to vector<32x128xf32>
    %183 = arith.addf %179, %182 : vector<32x128xf32>
    %c0_57 = arith.constant 0 : index
    %c0_58 = arith.constant 0 : index
    %184 = vector.load %arg2[%c0_57, %c0_58] : memref<32x128xf32, #tpu.memory_space<vmem>>, vector<32x128xf32>
    tpu.vector_store %arg2[%c0_57, %c0_58], %183 {strides = array<i32>} : memref<32x128xf32, #tpu.memory_space<vmem>>, vector<32x128xf32>,
    return
  }
}

</mosaic_0001>

<llo_original>
// kernel: wavenet_forward_pallas.2
$region0: #{wavenet_forward_pallas.2}
  #allocation0 [shape = 'u32[]', space=smem, size = 0x4, offset = 0x4, fixed_abs, tag = 'smem constant byte address 0x4 - core index']
  #allocation1 [shape = 'u32[72,128]{1,0:T(1,128)}', space=vmem, size = 0x9000, scoped, tag = 'internal scratch']
  #allocation2 [shape = 'u32[2048]{0}', space=vmem, size = 0x2000, scoped, tag = 'scoped memory for wavenet_forward_pallas.2']
  #allocation3 [shape = 'u32[2048]{0}', space=vmem, size = 0x2000, scoped, tag = 'scoped memory for wavenet_forward_pallas.2']
  #allocation4 [shape = 'u32[2048]{0}', space=vmem, size = 0x2000, scoped, tag = 'scoped memory for wavenet_forward_pallas.2']
  #allocation5 [shape = 'u32[2048]{0}', space=vmem, size = 0x2000, scoped, tag = 'scoped memory for wavenet_forward_pallas.2']
  #allocation6 [shape = 'u32[2048]{0}', space=vmem, size = 0x2000, scoped, tag = 'scoped memory for wavenet_forward_pallas.2']
  %s0 = inlined_call_operand.vmem [shape: bf16[624,32], index: 0, kind: input, shape index: {}]
  %s1 = inlined_call_operand.vmem [shape: f32[32,48], index: 1, kind: input, shape index: {}]
  %s2 = inlined_call_operand.<no memory space> [shape: f32[], index: 2, kind: input, shape index: {}]
  %s3 = inlined_call_operand.vmem [shape: f32[32,128], index: 3, kind: output, shape index: {}]
  %s4 = sld [smem:[#allocation0]]
  $region18: #{wavenet_forward_pallas.2} parent=0
    _
  %s6 = ssub.s32 1, %s4
  %s7 = scalar_select 0, %s6, %s4
  %v8 = vstv %s2
  $region1: #{wavenet_forward_pallas.2} parent=0
    #allocation7 [shape = 'u8[16384]{0}', space=vmem, size = 0x4000, dematerialized = true, scoped, tag = 'FusionAdapter Buffer %fusion.1 = f32[32,128]{1,0:T(8,128)} fusion(%param_1.1, %param_2), kind=kLoop, calls=%fused_computation.1.clone, metadata={op_name="jit(wavenet_forward_pallas)/jit(_pad)/pad" stack_frame_id=8}']
    // Predicated region
    $region2: #{wavenet_forward_pallas.2} parent=1 // pred_check
      _
    $region3: #{wavenet_forward_pallas.2} parent=1 // pred_check_branch
      %10 = sbr.rel (0) target = $region5
    $region4: #{wavenet_forward_pallas.2} parent=1 // pred_region
      %s12 = ssub.s32 1, 0
      %s13 = smul.u32 32, %s12
      %p14 = scmp.lt.s32.totalorder 0, 0
      %s15 = scalar_select %p14, 0, 0
      %s16 = smul.addr %s15, 8
      %s17 = scalar_lea.vmem %s1, %s16
      %s19 = ssub.s32 1, 0
      %s20 = smul.u32 32, %s19
    $region5: #{wavenet_forward_pallas.2} parent=1 // pred_fallthru
      _
    // Predicated region
    $region6: #{wavenet_forward_pallas.2} parent=1 // pred_check
      _
    $region7: #{wavenet_forward_pallas.2} parent=1 // pred_check_branch
      %22 = sbr.rel (0) target = $region9
    $region8: #{wavenet_forward_pallas.2} parent=1 // pred_region
      _
    $region9: #{wavenet_forward_pallas.2} parent=1 // pred_fallthru
      _
    %s24 = ssub.s32 1, 0
    %s25 = smul.u32 32, %s24
    %p26 = scmp.lt.s32.totalorder 0, 0
    %s27 = scalar_select %p26, 0, 0
    %s28 = smul.addr %s27, 8
    %s29 = scalar_lea.vmem %s1, %s28
    %s31 = ssub.s32 1, 0
    %s32 = smul.u32 32, %s31
    %p33 = scmp.lt.s32.totalorder 0, 0
    %s34 = scalar_select %p33, 0, 0
    %s35 = smul.addr %s34, 8
    %s36 = scalar_lea.vmem %s1, %s35
    %s38 = ssub.s32 1, 0
    %s39 = smul.u32 32, %s38
    %s40 = ssub.s32 0, 0
    %p41 = scmp.lt.s32.totalorder %s40, 0
    %s42 = scalar_select %p41, 0, 255
    %v43 = vld [vmem:[%s36] sm:%s42]
    %v44 = vlaneseq
    %v45 = vand.u32 %v44, 127
    %v46 = vadd.s32 %v45, 128
    %vm47 = vcmp.lt.s32.totalorder %v46, 176
    %v48 = vsel %vm47, %v43, %v8
    %v49 = vlaneseq
    %v50 = vand.u32 %v49, 127
    %vm51 = vcmp.lt.s32.totalorder %v50, 48
    %v52 = vsel %vm51, %v48, %v8
    %53 = vrot.lane.b32.xlu0 %v52, 80
    %v54 = vpop.permute.xlu0 %53
    %s56 = ssub.s32 256, 1
    %57 = vst [vmem:[#allocation7] sm:%s56] %v54
    %s58 = scalar_lea.vmem %s36, 8
    %s59 = ssub.s32 0, 0
    %p60 = scmp.lt.s32.totalorder %s59, 0
    %s61 = scalar_select %p60, 0, 255
    %v62 = vld [vmem:[%s58] sm:%s61]
    %s63 = scalar_lea.vmem %s36, 8
    %v64 = vlaneseq
    %v65 = vand.u32 %v64, 127
    %v66 = vadd.s32 %v65, 128
    %vm67 = vcmp.lt.s32.totalorder %v66, 176
    %v68 = vsel %vm67, %v62, %v8
    %v69 = vlaneseq
    %v70 = vand.u32 %v69, 127
    %vm71 = vcmp.lt.s32.totalorder %v70, 48
    %v72 = vsel %vm71, %v68, %v8
    %73 = vrot.lane.b32.xlu0 %v72, 80
    %v74 = vpop.permute.xlu0 %73
    %s75 = scalar_lea.vmem [#allocation7], 8
    %s77 = ssub.s32 256, 1
    %78 = vst [vmem:[%s75] sm:%s77] %v74
    %s79 = scalar_lea.vmem %s36, 16
    %s80 = ssub.s32 0, 0
    %p81 = scmp.lt.s32.totalorder %s80, 0
    %s82 = scalar_select %p81, 0, 255
    %v83 = vld [vmem:[%s79] sm:%s82]
    %s84 = scalar_lea.vmem %s36, 16
    %v85 = vlaneseq
    %v86 = vand.u32 %v85, 127
    %v87 = vadd.s32 %v86, 128
    %vm88 = vcmp.lt.s32.totalorder %v87, 176
    %v89 = vsel %vm88, %v83, %v8
    %v90 = vlaneseq
    %v91 = vand.u32 %v90, 127
    %vm92 = vcmp.lt.s32.totalorder %v91, 48
    %v93 = vsel %vm92, %v89, %v8
    %94 = vrot.lane.b32.xlu0 %v93, 80
    %v95 = vpop.permute.xlu0 %94
    %s96 = scalar_lea.vmem [#allocation7], 16
    %s98 = ssub.s32 256, 1
    %99 = vst [vmem:[%s96] sm:%s98] %v95
    %s100 = scalar_lea.vmem %s36, 24
    %s101 = ssub.s32 0, 0
    %p102 = scmp.lt.s32.totalorder %s101, 0
    %s103 = scalar_select %p102, 0, 255
    %v104 = vld [vmem:[%s100] sm:%s103]
    %s105 = scalar_lea.vmem %s36, 24
    %v106 = vlaneseq
    %v107 = vand.u32 %v106, 127
    %v108 = vadd.s32 %v107, 128
    %vm109 = vcmp.lt.s32.totalorder %v108, 176
    %v110 = vsel %vm109, %v104, %v8
    %v111 = vlaneseq
    %v112 = vand.u32 %v111, 127
    %vm113 = vcmp.lt.s32.totalorder %v112, 48
    %v114 = vsel %vm113, %v110, %v8
    %115 = vrot.lane.b32.xlu0 %v114, 80
    %v116 = vpop.permute.xlu0 %115
    %s117 = scalar_lea.vmem [#allocation7], 24
    %s119 = ssub.s32 256, 1
    %120 = vst [vmem:[%s117] sm:%s119] %v116
    %v122 = vlaneseq
    %v123 = vand.u32 %v122, 127
    %v124 = vld [vmem:[%s0] sm:$0xf]
    %v125 = vld [vmem:[%s0 + $0x4] sm:$0xf]
    %v126 = vld [vmem:[#allocation7] sm:$0xff]
    %v127 = vld [vmem:[#allocation7 + $0x8] sm:$0xff]
    %v128 = vld [vmem:[#allocation7 + $0x10] sm:$0xff]
    %v129 = vld [vmem:[#allocation7 + $0x18] sm:$0xff]
    %v130 = vpack.c.bf16 %v127, %v126
    %v131 = vpack.c.bf16 %v129, %v128
    %v134 = vunpack.c.l.b16 %v124
    %v135 = vunpack.c.l.b16 %v125
    %v136 = vpack.c.b16 %v135, %v134
    %vm137 = vcmask 261120
    %v139 = vsel %vm137, %v136, 0
    %141 = vmatpush.bf16.msra.mxu0 0
    %142 = vmatpush.bf16.msra.mxu0 0
    %143 = vmatpush.bf16.msra.mxu0 0
    %144 = vmatpush.bf16.msra.mxu0 0
    %145 = vmatpush.bf16.msra.mxu0 0
    %146 = vmatpush.bf16.msra.mxu0 0
    %147 = vmatpush.bf16.msra.mxu0 %v131
    %148 = vmatpush.bf16.msra.mxu0 %v130
    %149 = vmatmul.bf16.gmra.mxu0 %v139
    %v150 = vpop.f32.mrf.mxu0
    %v151 = vadd.f32 0.0, %v150
    %v152 = vpop.f32.mrf.mxu0
    %v153 = vadd.f32 0.0, %v152
    %154 = vdwg.mxu0
    %vm155 = vcmp.ge.s32.totalorder %v123, 82
    %156 = vrot.lane.b32.xlu0 %v151, 2
    %v157 = vpop.permute.xlu0 %156
    %158 = vrot.lane.b32.xlu0 %v153, 2
    %v159 = vpop.permute.xlu0 %158
    %v160 = vsel %vm155, %v157, 0.0
    %v161 = vsel %vm155, %v159, 0.0
    %v162 = vsel %vm155, %v151, 0.0
    %v163 = vsel %vm155, %v153, 0.0
    %v164 = vpack.c.bf16 %v161, %v160
    %v165 = vpack.c.bf16 %v163, %v162
    %v166 = vld [vmem:[%s0 + $0x8] sm:$0xf]
    %v167 = vld [vmem:[%s0 + $0xc] sm:$0xf]
    %v168 = vld [vmem:[%s0 + $0x10] sm:$0xf]
    %v169 = vld [vmem:[%s0 + $0x14] sm:$0xf]
    %v174 = vunpack.c.l.b16 %v166
    %v175 = vunpack.c.l.b16 %v167
    %v176 = vunpack.c.l.b16 %v168
    %v177 = vunpack.c.l.b16 %v169
    %v178 = vpack.c.b16 %v175, %v174
    %v179 = vpack.c.b16 %v177, %v176
    %v181 = vsel %vm137, %v178, 0
    %v184 = vsel %vm137, %v179, 0
    %186 = vmatpush.bf16.msra.mxu0 0
    %187 = vmatpush.bf16.msra.mxu0 0
    %188 = vmatpush.bf16.msra.mxu0 0
    %189 = vmatpush.bf16.msra.mxu0 0
    %190 = vmatpush.bf16.msra.mxu0 0
    %191 = vmatpush.bf16.msra.mxu0 0
    %192 = vmatpush.bf16.msra.mxu0 %v165
    %193 = vmatpush.bf16.msra.mxu0 %v164
    %194 = vmatmul.bf16.gmra.mxu0 %v181
    %v195 = vpop.f32.mrf.mxu0
    %v196 = vadd.f32 0.0, %v195
    %v197 = vpop.f32.mrf.mxu0
    %v198 = vadd.f32 0.0, %v197
    %199 = vmatmul.bf16.gmra.mxu0 %v184
    %v200 = vpop.f32.mrf.mxu0
    %v201 = vadd.f32 0.0, %v200
    %v202 = vpop.f32.mrf.mxu0
    %v203 = vadd.f32 0.0, %v202
    %204 = vdwg.mxu0
    %v205 = vtanh.pop %v196
    %v206 = vtanh.pop %v198
    %v207 = vxor.u32 %v201, 2147483648
    %v208 = vxor.u32 %v203, 2147483648
    %v209 = vmul.f32 %v207, 1.442695
    %v210 = vpow.pop %v209
    %v211 = vmul.f32 %v208, 1.442695
    %v212 = vpow.pop %v211
    %v213 = vadd.f32 %v210, 1.0
    %v214 = vadd.f32 %v212, 1.0
    %v215 = vrcp.pop %v213
    %v216 = vmul.f32 %v213, %v215
    %v217 = vsub.f32 1.0, %v216
    %v218 = vmul.f32 %v215, %v217
    %v219 = vadd.f32 %v215, %v218
    %vm220 = vweird.f32 %v213
    %vm221 = vweird.f32 %v215
    %vm222 = vmor %vm220, %vm221
    %v223 = vsel %vm222, %v215, %v219
    %v224 = vand.u32 2147483647, %v213
    %vm225 = vcmp.eq.f32.partialorder %v224, 8.507059e+37
    %v226 = vand.u32 %v213, 2147483648
    %v227 = vor.u32 1.1754944e-38, %v226
    %v228 = vsel %vm225, %v227, %v223
    %v229 = vmul.f32 1.0, %v228
    %v230 = vrcp.pop %v214
    %v231 = vmul.f32 %v214, %v230
    %v232 = vsub.f32 1.0, %v231
    %v233 = vmul.f32 %v230, %v232
    %v234 = vadd.f32 %v230, %v233
    %vm235 = vweird.f32 %v214
    %vm236 = vweird.f32 %v230
    %vm237 = vmor %vm235, %vm236
    %v238 = vsel %vm237, %v230, %v234
    %v239 = vand.u32 2147483647, %v214
    %vm240 = vcmp.eq.f32.partialorder %v239, 8.507059e+37
    %v241 = vand.u32 %v214, 2147483648
    %v242 = vor.u32 1.1754944e-38, %v241
    %v243 = vsel %vm240, %v242, %v238
    %v244 = vmul.f32 1.0, %v243
    %v245 = vmul.f32 %v205, %v229
    %v246 = vmul.f32 %v206, %v244
    %v247 = vld [vmem:[%s0 + $0x68] sm:$0xf]
    %v248 = vld [vmem:[%s0 + $0x6c] sm:$0xf]
    %v249 = vld [vmem:[%s0 + $0x70] sm:$0xf]
    %v250 = vld [vmem:[%s0 + $0x74] sm:$0xf]
    %v251 = vld [vmem:[%s0 + $0x78] sm:$0xf]
    %v252 = vld [vmem:[%s0 + $0x7c] sm:$0xf]
    %v253 = vpack.c.bf16 %v246, %v245
    %v260 = vunpack.c.l.b16 %v247
    %v261 = vunpack.c.l.b16 %v248
    %v262 = vunpack.c.l.b16 %v249
    %v263 = vunpack.c.l.b16 %v250
    %v264 = vunpack.c.l.b16 %v251
    %v265 = vunpack.c.l.b16 %v252
    %v266 = vpack.c.b16 %v261, %v260
    %v267 = vpack.c.b16 %v263, %v262
    %v268 = vpack.c.b16 %v265, %v264
    %vm269 = vcmask 130048
    %v271 = vsel %vm269, %v266, 0
    %v274 = vsel %vm269, %v267, 0
    %v277 = vsel %vm269, %v268, 0
    %279 = vmatpush.bf16.msra.mxu0 0
    %280 = vmatpush.bf16.msra.mxu0 0
    %281 = vmatpush.bf16.msra.mxu0 0
    %282 = vmatpush.bf16.msra.mxu0 0
    %283 = vmatpush.bf16.msra.mxu0 0
    %284 = vmatpush.bf16.msra.mxu0 0
    %285 = vmatpush.bf16.msra.mxu0 0
    %286 = vmatpush.bf16.msra.mxu0 %v253
    %287 = vmatmul.bf16.gmra.mxu0 %v271
    %v288 = vpop.f32.mrf.mxu0
    %v289 = vadd.f32 0.0, %v288
    %v290 = vpop.f32.mrf.mxu0
    %v291 = vadd.f32 0.0, %v290
    %292 = vmatmul.bf16.gmra.mxu0 %v274
    %v293 = vpop.f32.mrf.mxu0
    %v294 = vadd.f32 0.0, %v293
    %v295 = vpop.f32.mrf.mxu0
    %v296 = vadd.f32 0.0, %v295
    %297 = vmatmul.bf16.gmra.mxu0 %v277
    %v298 = vpop.f32.mrf.mxu0
    %v299 = vadd.f32 0.0, %v298
    %v300 = vpop.f32.mrf.mxu0
    %v301 = vadd.f32 0.0, %v300
    %302 = vdwg.mxu0
    %v303 = vadd.f32 %v289, 0.0
    %v304 = vadd.f32 %v291, 0.0
    %v305 = vadd.f32 %v294, 0.0
    %v306 = vadd.f32 %v296, 0.0
    %v307 = vadd.f32 %v299, %v162
    %v308 = vadd.f32 %v301, %v163
    %vm309 = vcmp.ge.s32.totalorder %v123, 84
    %310 = vrot.lane.b32.xlu0 %v307, 4
    %v311 = vpop.permute.xlu0 %310
    %312 = vrot.lane.b32.xlu0 %v308, 4
    %v313 = vpop.permute.xlu0 %312
    %v314 = vsel %vm309, %v311, 0.0
    %v315 = vsel %vm309, %v313, 0.0
    %v316 = vsel %vm309, %v307, 0.0
    %v317 = vsel %vm309, %v308, 0.0
    %v318 = vpack.c.bf16 %v315, %v314
    %v319 = vpack.c.bf16 %v317, %v316
    %v320 = vld [vmem:[%s0 + $0x18] sm:$0xf]
    %v321 = vld [vmem:[%s0 + $0x1c] sm:$0xf]
    %v322 = vld [vmem:[%s0 + $0x20] sm:$0xf]
    %v323 = vld [vmem:[%s0 + $0x24] sm:$0xf]
    %v328 = vunpack.c.l.b16 %v320
    %v329 = vunpack.c.l.b16 %v321
    %v330 = vunpack.c.l.b16 %v322
    %v331 = vunpack.c.l.b16 %v323
    %v332 = vpack.c.b16 %v329, %v328
    %v333 = vpack.c.b16 %v331, %v330
    %v335 = vsel %vm137, %v332, 0
    %v338 = vsel %vm137, %v333, 0
    %340 = vmatpush.bf16.msra.mxu0 0
    %341 = vmatpush.bf16.msra.mxu0 0
    %342 = vmatpush.bf16.msra.mxu0 0
    %343 = vmatpush.bf16.msra.mxu0 0
    %344 = vmatpush.bf16.msra.mxu0 0
    %345 = vmatpush.bf16.msra.mxu0 0
    %346 = vmatpush.bf16.msra.mxu0 %v319
    %347 = vmatpush.bf16.msra.mxu0 %v318
    %348 = vmatmul.bf16.gmra.mxu0 %v335
    %v349 = vpop.f32.mrf.mxu0
    %v350 = vadd.f32 0.0, %v349
    %v351 = vpop.f32.mrf.mxu0
    %v352 = vadd.f32 0.0, %v351
    %353 = vmatmul.bf16.gmra.mxu0 %v338
    %v354 = vpop.f32.mrf.mxu0
    %v355 = vadd.f32 0.0, %v354
    %v356 = vpop.f32.mrf.mxu0
    %v357 = vadd.f32 0.0, %v356
    %358 = vdwg.mxu0
    %v359 = vtanh.pop %v350
    %v360 = vtanh.pop %v352
    %v361 = vxor.u32 %v355, 2147483648
    %v362 = vxor.u32 %v357, 2147483648
    %v363 = vmul.f32 %v361, 1.442695
    %v364 = vpow.pop %v363
    %v365 = vmul.f32 %v362, 1.442695
    %v366 = vpow.pop %v365
    %v367 = vadd.f32 %v364, 1.0
    %v368 = vadd.f32 %v366, 1.0
    %v369 = vrcp.pop %v367
    %v370 = vmul.f32 %v367, %v369
    %v371 = vsub.f32 1.0, %v370
    %v372 = vmul.f32 %v369, %v371
    %v373 = vadd.f32 %v369, %v372
    %vm374 = vweird.f32 %v367
    %vm375 = vweird.f32 %v369
    %vm376 = vmor %vm374, %vm375
    %v377 = vsel %vm376, %v369, %v373
    %v378 = vand.u32 2147483647, %v367
    %vm379 = vcmp.eq.f32.partialorder %v378, 8.507059e+37
    %v380 = vand.u32 %v367, 2147483648
    %v381 = vor.u32 1.1754944e-38, %v380
    %v382 = vsel %vm379, %v381, %v377
    %v383 = vmul.f32 1.0, %v382
    %v384 = vrcp.pop %v368
    %v385 = vmul.f32 %v368, %v384
    %v386 = vsub.f32 1.0, %v385
    %v387 = vmul.f32 %v384, %v386
    %v388 = vadd.f32 %v384, %v387
    %vm389 = vweird.f32 %v368
    %vm390 = vweird.f32 %v384
    %vm391 = vmor %vm389, %vm390
    %v392 = vsel %vm391, %v384, %v388
    %v393 = vand.u32 2147483647, %v368
    %vm394 = vcmp.eq.f32.partialorder %v393, 8.507059e+37
    %v395 = vand.u32 %v368, 2147483648
    %v396 = vor.u32 1.1754944e-38, %v395
    %v397 = vsel %vm394, %v396, %v392
    %v398 = vmul.f32 1.0, %v397
    %v399 = vmul.f32 %v359, %v383
    %v400 = vmul.f32 %v360, %v398
    %v401 = vld [vmem:[%s0 + $0x80] sm:$0xf]
    %v402 = vld [vmem:[%s0 + $0x84] sm:$0xf]
    %v403 = vld [vmem:[%s0 + $0x88] sm:$0xf]
    %v404 = vld [vmem:[%s0 + $0x8c] sm:$0xf]
    %v405 = vld [vmem:[%s0 + $0x90] sm:$0xf]
    %v406 = vld [vmem:[%s0 + $0x94] sm:$0xf]
    %v407 = vpack.c.bf16 %v400, %v399
    %v414 = vunpack.c.l.b16 %v401
    %v415 = vunpack.c.l.b16 %v402
    %v416 = vunpack.c.l.b16 %v403
    %v417 = vunpack.c.l.b16 %v404
    %v418 = vunpack.c.l.b16 %v405
    %v419 = vunpack.c.l.b16 %v406
    %v420 = vpack.c.b16 %v415, %v414
    %v421 = vpack.c.b16 %v417, %v416
    %v422 = vpack.c.b16 %v419, %v418
    %v424 = vsel %vm269, %v420, 0
    %v427 = vsel %vm269, %v421, 0
    %v430 = vsel %vm269, %v422, 0
    %432 = vmatpush.bf16.msra.mxu0 0
    %433 = vmatpush.bf16.msra.mxu0 0
    %434 = vmatpush.bf16.msra.mxu0 0
    %435 = vmatpush.bf16.msra.mxu0 0
    %436 = vmatpush.bf16.msra.mxu0 0
    %437 = vmatpush.bf16.msra.mxu0 0
    %438 = vmatpush.bf16.msra.mxu0 0
    %439 = vmatpush.bf16.msra.mxu0 %v407
    %440 = vmatmul.bf16.gmra.mxu0 %v424
    %v441 = vpop.f32.mrf.mxu0
    %v442 = vadd.f32 0.0, %v441
    %v443 = vpop.f32.mrf.mxu0
    %v444 = vadd.f32 0.0, %v443
    %445 = vmatmul.bf16.gmra.mxu0 %v427
    %v446 = vpop.f32.mrf.mxu0
    %v447 = vadd.f32 0.0, %v446
    %v448 = vpop.f32.mrf.mxu0
    %v449 = vadd.f32 0.0, %v448
    %450 = vmatmul.bf16.gmra.mxu0 %v430
    %v451 = vpop.f32.mrf.mxu0
    %v452 = vadd.f32 0.0, %v451
    %v453 = vpop.f32.mrf.mxu0
    %v454 = vadd.f32 0.0, %v453
    %455 = vdwg.mxu0
    %v456 = vadd.f32 %v303, %v442
    %v457 = vadd.f32 %v304, %v444
    %v458 = vadd.f32 %v305, %v447
    %v459 = vadd.f32 %v306, %v449
    %v460 = vadd.f32 %v452, %v316
    %v461 = vadd.f32 %v454, %v317
    %vm462 = vcmp.ge.s32.totalorder %v123, 88
    %463 = vrot.lane.b32.xlu0 %v460, 8
    %v464 = vpop.permute.xlu0 %463
    %465 = vrot.lane.b32.xlu0 %v461, 8
    %v466 = vpop.permute.xlu0 %465
    %v467 = vsel %vm462, %v464, 0.0
    %v468 = vsel %vm462, %v466, 0.0
    %v469 = vsel %vm462, %v460, 0.0
    %v470 = vsel %vm462, %v461, 0.0
    %v471 = vpack.c.bf16 %v468, %v467
    %v472 = vpack.c.bf16 %v470, %v469
    %v473 = vld [vmem:[%s0 + $0x28] sm:$0xf]
    %v474 = vld [vmem:[%s0 + $0x2c] sm:$0xf]
    %v475 = vld [vmem:[%s0 + $0x30] sm:$0xf]
    %v476 = vld [vmem:[%s0 + $0x34] sm:$0xf]
    %v481 = vunpack.c.l.b16 %v473
    %v482 = vunpack.c.l.b16 %v474
    %v483 = vunpack.c.l.b16 %v475
    %v484 = vunpack.c.l.b16 %v476
    %v485 = vpack.c.b16 %v482, %v481
    %v486 = vpack.c.b16 %v484, %v483
    %v488 = vsel %vm137, %v485, 0
    %v491 = vsel %vm137, %v486, 0
    %493 = vmatpush.bf16.msra.mxu0 0
    %494 = vmatpush.bf16.msra.mxu0 0
    %495 = vmatpush.bf16.msra.mxu0 0
    %496 = vmatpush.bf16.msra.mxu0 0
    %497 = vmatpush.bf16.msra.mxu0 0
    %498 = vmatpush.bf16.msra.mxu0 0
    %499 = vmatpush.bf16.msra.mxu0 %v472
    %500 = vmatpush.bf16.msra.mxu0 %v471
    %501 = vmatmul.bf16.gmra.mxu0 %v488
    %v502 = vpop.f32.mrf.mxu0
    %v503 = vadd.f32 0.0, %v502
    %v504 = vpop.f32.mrf.mxu0
    %v505 = vadd.f32 0.0, %v504
    %506 = vmatmul.bf16.gmra.mxu0 %v491
    %v507 = vpop.f32.mrf.mxu0
    %v508 = vadd.f32 0.0, %v507
    %v509 = vpop.f32.mrf.mxu0
    %v510 = vadd.f32 0.0, %v509
    %511 = vdwg.mxu0
    %v512 = vtanh.pop %v503
    %v513 = vtanh.pop %v505
    %v514 = vxor.u32 %v508, 2147483648
    %v515 = vxor.u32 %v510, 2147483648
    %v516 = vmul.f32 %v514, 1.442695
    %v517 = vpow.pop %v516
    %v518 = vmul.f32 %v515, 1.442695
    %v519 = vpow.pop %v518
    %v520 = vadd.f32 %v517, 1.0
    %v521 = vadd.f32 %v519, 1.0
    %v522 = vrcp.pop %v520
    %v523 = vmul.f32 %v520, %v522
    %v524 = vsub.f32 1.0, %v523
    %v525 = vmul.f32 %v522, %v524
    %v526 = vadd.f32 %v522, %v525
    %vm527 = vweird.f32 %v520
    %vm528 = vweird.f32 %v522
    %vm529 = vmor %vm527, %vm528
    %v530 = vsel %vm529, %v522, %v526
    %v531 = vand.u32 2147483647, %v520
    %vm532 = vcmp.eq.f32.partialorder %v531, 8.507059e+37
    %v533 = vand.u32 %v520, 2147483648
    %v534 = vor.u32 1.1754944e-38, %v533
    %v535 = vsel %vm532, %v534, %v530
    %v536 = vmul.f32 1.0, %v535
    %v537 = vrcp.pop %v521
    %v538 = vmul.f32 %v521, %v537
    %v539 = vsub.f32 1.0, %v538
    %v540 = vmul.f32 %v537, %v539
    %v541 = vadd.f32 %v537, %v540
    %vm542 = vweird.f32 %v521
    %vm543 = vweird.f32 %v537
    %vm544 = vmor %vm542, %vm543
    %v545 = vsel %vm544, %v537, %v541
    %v546 = vand.u32 2147483647, %v521
    %vm547 = vcmp.eq.f32.partialorder %v546, 8.507059e+37
    %v548 = vand.u32 %v521, 2147483648
    %v549 = vor.u32 1.1754944e-38, %v548
    %v550 = vsel %vm547, %v549, %v545
    %v551 = vmul.f32 1.0, %v550
    %v552 = vmul.f32 %v512, %v536
    %v553 = vmul.f32 %v513, %v551
    %v554 = vld [vmem:[%s0 + $0x98] sm:$0xf]
    %v555 = vld [vmem:[%s0 + $0x9c] sm:$0xf]
    %v556 = vld [vmem:[%s0 + $0xa0] sm:$0xf]
    %v557 = vld [vmem:[%s0 + $0xa4] sm:$0xf]
    %v558 = vld [vmem:[%s0 + $0xa8] sm:$0xf]
    %v559 = vld [vmem:[%s0 + $0xac] sm:$0xf]
    %v560 = vpack.c.bf16 %v553, %v552
    %v567 = vunpack.c.l.b16 %v554
    %v568 = vunpack.c.l.b16 %v555
    %v569 = vunpack.c.l.b16 %v556
    %v570 = vunpack.c.l.b16 %v557
    %v571 = vunpack.c.l.b16 %v558
    %v572 = vunpack.c.l.b16 %v559
    %v573 = vpack.c.b16 %v568, %v567
    %v574 = vpack.c.b16 %v570, %v569
    %v575 = vpack.c.b16 %v572, %v571
    %v577 = vsel %vm269, %v573, 0
    %v580 = vsel %vm269, %v574, 0
    %v583 = vsel %vm269, %v575, 0
    %585 = vmatpush.bf16.msra.mxu0 0
    %586 = vmatpush.bf16.msra.mxu0 0
    %587 = vmatpush.bf16.msra.mxu0 0
    %588 = vmatpush.bf16.msra.mxu0 0
    %589 = vmatpush.bf16.msra.mxu0 0
    %590 = vmatpush.bf16.msra.mxu0 0
    %591 = vmatpush.bf16.msra.mxu0 0
    %592 = vmatpush.bf16.msra.mxu0 %v560
    %593 = vmatmul.bf16.gmra.mxu0 %v577
    %v594 = vpop.f32.mrf.mxu0
    %v595 = vadd.f32 0.0, %v594
    %v596 = vpop.f32.mrf.mxu0
    %v597 = vadd.f32 0.0, %v596
    %598 = vmatmul.bf16.gmra.mxu0 %v580
    %v599 = vpop.f32.mrf.mxu0
    %v600 = vadd.f32 0.0, %v599
    %v601 = vpop.f32.mrf.mxu0
    %v602 = vadd.f32 0.0, %v601
    %603 = vmatmul.bf16.gmra.mxu0 %v583
    %v604 = vpop.f32.mrf.mxu0
    %v605 = vadd.f32 0.0, %v604
    %v606 = vpop.f32.mrf.mxu0
    %v607 = vadd.f32 0.0, %v606
    %608 = vdwg.mxu0
    %v609 = vadd.f32 %v456, %v595
    %v610 = vadd.f32 %v457, %v597
    %v611 = vadd.f32 %v458, %v600
    %v612 = vadd.f32 %v459, %v602
    %v613 = vadd.f32 %v605, %v469
    %v614 = vadd.f32 %v607, %v470
    %vm615 = vcmp.ge.s32.totalorder %v123, 90
    %616 = vrot.lane.b32.xlu0 %v613, 2
    %v617 = vpop.permute.xlu0 %616
    %618 = vrot.lane.b32.xlu0 %v614, 2
    %v619 = vpop.permute.xlu0 %618
    %v620 = vsel %vm615, %v617, 0.0
    %v621 = vsel %vm615, %v619, 0.0
    %v622 = vsel %vm615, %v613, 0.0
    %v623 = vsel %vm615, %v614, 0.0
    %v624 = vpack.c.bf16 %v621, %v620
    %v625 = vpack.c.bf16 %v623, %v622
    %v626 = vld [vmem:[%s0 + $0x38] sm:$0xf]
    %v627 = vld [vmem:[%s0 + $0x3c] sm:$0xf]
    %v628 = vld [vmem:[%s0 + $0x40] sm:$0xf]
    %v629 = vld [vmem:[%s0 + $0x44] sm:$0xf]
    %v634 = vunpack.c.l.b16 %v626
    %v635 = vunpack.c.l.b16 %v627
    %v636 = vunpack.c.l.b16 %v628
    %v637 = vunpack.c.l.b16 %v629
    %v638 = vpack.c.b16 %v635, %v634
    %v639 = vpack.c.b16 %v637, %v636
    %v641 = vsel %vm137, %v638, 0
    %v644 = vsel %vm137, %v639, 0
    %646 = vmatpush.bf16.msra.mxu0 0
    %647 = vmatpush.bf16.msra.mxu0 0
    %648 = vmatpush.bf16.msra.mxu0 0
    %649 = vmatpush.bf16.msra.mxu0 0
    %650 = vmatpush.bf16.msra.mxu0 0
    %651 = vmatpush.bf16.msra.mxu0 0
    %652 = vmatpush.bf16.msra.mxu0 %v625
    %653 = vmatpush.bf16.msra.mxu0 %v624
    %654 = vmatmul.bf16.gmra.mxu0 %v641
    %v655 = vpop.f32.mrf.mxu0
    %v656 = vadd.f32 0.0, %v655
    %v657 = vpop.f32.mrf.mxu0
    %v658 = vadd.f32 0.0, %v657
    %659 = vmatmul.bf16.gmra.mxu0 %v644
    %v660 = vpop.f32.mrf.mxu0
    %v661 = vadd.f32 0.0, %v660
    %v662 = vpop.f32.mrf.mxu0
    %v663 = vadd.f32 0.0, %v662
    %664 = vdwg.mxu0
    %v665 = vtanh.pop %v656
    %v666 = vtanh.pop %v658
    %v667 = vxor.u32 %v661, 2147483648
    %v668 = vxor.u32 %v663, 2147483648
    %v669 = vmul.f32 %v667, 1.442695
    %v670 = vpow.pop %v669
    %v671 = vmul.f32 %v668, 1.442695
    %v672 = vpow.pop %v671
    %v673 = vadd.f32 %v670, 1.0
    %v674 = vadd.f32 %v672, 1.0
    %v675 = vrcp.pop %v673
    %v676 = vmul.f32 %v673, %v675
    %v677 = vsub.f32 1.0, %v676
    %v678 = vmul.f32 %v675, %v677
    %v679 = vadd.f32 %v675, %v678
    %vm680 = vweird.f32 %v673
    %vm681 = vweird.f32 %v675
    %vm682 = vmor %vm680, %vm681
    %v683 = vsel %vm682, %v675, %v679
    %v684 = vand.u32 2147483647, %v673
    %vm685 = vcmp.eq.f32.partialorder %v684, 8.507059e+37
    %v686 = vand.u32 %v673, 2147483648
    %v687 = vor.u32 1.1754944e-38, %v686
    %v688 = vsel %vm685, %v687, %v683
    %v689 = vmul.f32 1.0, %v688
    %v690 = vrcp.pop %v674
    %v691 = vmul.f32 %v674, %v690
    %v692 = vsub.f32 1.0, %v691
    %v693 = vmul.f32 %v690, %v692
    %v694 = vadd.f32 %v690, %v693
    %vm695 = vweird.f32 %v674
    %vm696 = vweird.f32 %v690
    %vm697 = vmor %vm695, %vm696
    %v698 = vsel %vm697, %v690, %v694
    %v699 = vand.u32 2147483647, %v674
    %vm700 = vcmp.eq.f32.partialorder %v699, 8.507059e+37
    %v701 = vand.u32 %v674, 2147483648
    %v702 = vor.u32 1.1754944e-38, %v701
    %v703 = vsel %vm700, %v702, %v698
    %v704 = vmul.f32 1.0, %v703
    %v705 = vmul.f32 %v665, %v689
    %v706 = vmul.f32 %v666, %v704
    %v707 = vld [vmem:[%s0 + $0xb0] sm:$0xf]
    %v708 = vld [vmem:[%s0 + $0xb4] sm:$0xf]
    %v709 = vld [vmem:[%s0 + $0xb8] sm:$0xf]
    %v710 = vld [vmem:[%s0 + $0xbc] sm:$0xf]
    %v711 = vld [vmem:[%s0 + $0xc0] sm:$0xf]
    %v712 = vld [vmem:[%s0 + $0xc4] sm:$0xf]
    %v713 = vpack.c.bf16 %v706, %v705
    %v720 = vunpack.c.l.b16 %v707
    %v721 = vunpack.c.l.b16 %v708
    %v722 = vunpack.c.l.b16 %v709
    %v723 = vunpack.c.l.b16 %v710
    %v724 = vunpack.c.l.b16 %v711
    %v725 = vunpack.c.l.b16 %v712
    %v726 = vpack.c.b16 %v721, %v720
    %v727 = vpack.c.b16 %v723, %v722
    %v728 = vpack.c.b16 %v725, %v724
    %v730 = vsel %vm269, %v726, 0
    %v733 = vsel %vm269, %v727, 0
    %v736 = vsel %vm269, %v728, 0
    %738 = vmatpush.bf16.msra.mxu0 0
    %739 = vmatpush.bf16.msra.mxu0 0
    %740 = vmatpush.bf16.msra.mxu0 0
    %741 = vmatpush.bf16.msra.mxu0 0
    %742 = vmatpush.bf16.msra.mxu0 0
    %743 = vmatpush.bf16.msra.mxu0 0
    %744 = vmatpush.bf16.msra.mxu0 0
    %745 = vmatpush.bf16.msra.mxu0 %v713
    %746 = vmatmul.bf16.gmra.mxu0 %v730
    %v747 = vpop.f32.mrf.mxu0
    %v748 = vadd.f32 0.0, %v747
    %v749 = vpop.f32.mrf.mxu0
    %v750 = vadd.f32 0.0, %v749
    %751 = vmatmul.bf16.gmra.mxu0 %v733
    %v752 = vpop.f32.mrf.mxu0
    %v753 = vadd.f32 0.0, %v752
    %v754 = vpop.f32.mrf.mxu0
    %v755 = vadd.f32 0.0, %v754
    %756 = vmatmul.bf16.gmra.mxu0 %v736
    %v757 = vpop.f32.mrf.mxu0
    %v758 = vadd.f32 0.0, %v757
    %v759 = vpop.f32.mrf.mxu0
    %v760 = vadd.f32 0.0, %v759
    %761 = vdwg.mxu0
    %v762 = vadd.f32 %v609, %v748
    %v763 = vadd.f32 %v610, %v750
    %v764 = vadd.f32 %v611, %v753
    %v765 = vadd.f32 %v612, %v755
    %v766 = vadd.f32 %v758, %v622
    %v767 = vadd.f32 %v760, %v623
    %vm768 = vcmp.ge.s32.totalorder %v123, 92
    %769 = vrot.lane.b32.xlu0 %v766, 4
    %v770 = vpop.permute.xlu0 %769
    %771 = vrot.lane.b32.xlu0 %v767, 4
    %v772 = vpop.permute.xlu0 %771
    %v773 = vsel %vm768, %v770, 0.0
    %v774 = vsel %vm768, %v772, 0.0
    %v775 = vsel %vm768, %v766, 0.0
    %v776 = vsel %vm768, %v767, 0.0
    %v777 = vpack.c.bf16 %v774, %v773
    %v778 = vpack.c.bf16 %v776, %v775
    %v779 = vld [vmem:[%s0 + $0x48] sm:$0xf]
    %v780 = vld [vmem:[%s0 + $0x4c] sm:$0xf]
    %v781 = vld [vmem:[%s0 + $0x50] sm:$0xf]
    %v782 = vld [vmem:[%s0 + $0x54] sm:$0xf]
    %v787 = vunpack.c.l.b16 %v779
    %v788 = vunpack.c.l.b16 %v780
    %v789 = vunpack.c.l.b16 %v781
    %v790 = vunpack.c.l.b16 %v782
    %v791 = vpack.c.b16 %v788, %v787
    %v792 = vpack.c.b16 %v790, %v789
    %v794 = vsel %vm137, %v791, 0
    %v797 = vsel %vm137, %v792, 0
    %799 = vmatpush.bf16.msra.mxu0 0
    %800 = vmatpush.bf16.msra.mxu0 0
    %801 = vmatpush.bf16.msra.mxu0 0
    %802 = vmatpush.bf16.msra.mxu0 0
    %803 = vmatpush.bf16.msra.mxu0 0
    %804 = vmatpush.bf16.msra.mxu0 0
    %805 = vmatpush.bf16.msra.mxu0 %v778
    %806 = vmatpush.bf16.msra.mxu0 %v777
    %807 = vmatmul.bf16.gmra.mxu0 %v794
    %v808 = vpop.f32.mrf.mxu0
    %v809 = vadd.f32 0.0, %v808
    %v810 = vpop.f32.mrf.mxu0
    %v811 = vadd.f32 0.0, %v810
    %812 = vmatmul.bf16.gmra.mxu0 %v797
    %v813 = vpop.f32.mrf.mxu0
    %v814 = vadd.f32 0.0, %v813
    %v815 = vpop.f32.mrf.mxu0
    %v816 = vadd.f32 0.0, %v815
    %817 = vdwg.mxu0
    %v818 = vtanh.pop %v809
    %v819 = vtanh.pop %v811
    %v820 = vxor.u32 %v814, 2147483648
    %v821 = vxor.u32 %v816, 2147483648
    %v822 = vmul.f32 %v820, 1.442695
    %v823 = vpow.pop %v822
    %v824 = vmul.f32 %v821, 1.442695
    %v825 = vpow.pop %v824
    %v826 = vadd.f32 %v823, 1.0
    %v827 = vadd.f32 %v825, 1.0
    %v828 = vrcp.pop %v826
    %v829 = vmul.f32 %v826, %v828
    %v830 = vsub.f32 1.0, %v829
    %v831 = vmul.f32 %v828, %v830
    %v832 = vadd.f32 %v828, %v831
    %vm833 = vweird.f32 %v826
    %vm834 = vweird.f32 %v828
    %vm835 = vmor %vm833, %vm834
    %v836 = vsel %vm835, %v828, %v832
    %v837 = vand.u32 2147483647, %v826
    %vm838 = vcmp.eq.f32.partialorder %v837, 8.507059e+37
    %v839 = vand.u32 %v826, 2147483648
    %v840 = vor.u32 1.1754944e-38, %v839
    %v841 = vsel %vm838, %v840, %v836
    %v842 = vmul.f32 1.0, %v841
    %v843 = vrcp.pop %v827
    %v844 = vmul.f32 %v827, %v843
    %v845 = vsub.f32 1.0, %v844
    %v846 = vmul.f32 %v843, %v845
    %v847 = vadd.f32 %v843, %v846
    %vm848 = vweird.f32 %v827
    %vm849 = vweird.f32 %v843
    %vm850 = vmor %vm848, %vm849
    %v851 = vsel %vm850, %v843, %v847
    %v852 = vand.u32 2147483647, %v827
    %vm853 = vcmp.eq.f32.partialorder %v852, 8.507059e+37
    %v854 = vand.u32 %v827, 2147483648
    %v855 = vor.u32 1.1754944e-38, %v854
    %v856 = vsel %vm853, %v855, %v851
    %v857 = vmul.f32 1.0, %v856
    %v858 = vmul.f32 %v818, %v842
    %v859 = vmul.f32 %v819, %v857
    %v860 = vld [vmem:[%s0 + $0xc8] sm:$0xf]
    %v861 = vld [vmem:[%s0 + $0xcc] sm:$0xf]
    %v862 = vld [vmem:[%s0 + $0xd0] sm:$0xf]
    %v863 = vld [vmem:[%s0 + $0xd4] sm:$0xf]
    %v864 = vld [vmem:[%s0 + $0xd8] sm:$0xf]
    %v865 = vld [vmem:[%s0 + $0xdc] sm:$0xf]
    %v866 = vpack.c.bf16 %v859, %v858
    %v873 = vunpack.c.l.b16 %v860
    %v874 = vunpack.c.l.b16 %v861
    %v875 = vunpack.c.l.b16 %v862
    %v876 = vunpack.c.l.b16 %v863
    %v877 = vunpack.c.l.b16 %v864
    %v878 = vunpack.c.l.b16 %v865
    %v879 = vpack.c.b16 %v874, %v873
    %v880 = vpack.c.b16 %v876, %v875
    %v881 = vpack.c.b16 %v878, %v877
    %v883 = vsel %vm269, %v879, 0
    %v886 = vsel %vm269, %v880, 0
    %v889 = vsel %vm269, %v881, 0
    %891 = vmatpush.bf16.msra.mxu0 0
    %892 = vmatpush.bf16.msra.mxu0 0
    %893 = vmatpush.bf16.msra.mxu0 0
    %894 = vmatpush.bf16.msra.mxu0 0
    %895 = vmatpush.bf16.msra.mxu0 0
    %896 = vmatpush.bf16.msra.mxu0 0
    %897 = vmatpush.bf16.msra.mxu0 0
    %898 = vmatpush.bf16.msra.mxu0 %v866
    %899 = vmatmul.bf16.gmra.mxu0 %v883
    %v900 = vpop.f32.mrf.mxu0
    %v901 = vadd.f32 0.0, %v900
    %v902 = vpop.f32.mrf.mxu0
    %v903 = vadd.f32 0.0, %v902
    %904 = vmatmul.bf16.gmra.mxu0 %v886
    %v905 = vpop.f32.mrf.mxu0
    %v906 = vadd.f32 0.0, %v905
    %v907 = vpop.f32.mrf.mxu0
    %v908 = vadd.f32 0.0, %v907
    %909 = vmatmul.bf16.gmra.mxu0 %v889
    %v910 = vpop.f32.mrf.mxu0
    %v911 = vadd.f32 0.0, %v910
    %v912 = vpop.f32.mrf.mxu0
    %v913 = vadd.f32 0.0, %v912
    %914 = vdwg.mxu0
    %v915 = vadd.f32 %v762, %v901
    %v916 = vadd.f32 %v763, %v903
    %v917 = vadd.f32 %v764, %v906
    %v918 = vadd.f32 %v765, %v908
    %v919 = vadd.f32 %v911, %v775
    %v920 = vadd.f32 %v913, %v776
    %vm921 = vcmp.ge.s32.totalorder %v123, 96
    %922 = vrot.lane.b32.xlu0 %v919, 8
    %v923 = vpop.permute.xlu0 %922
    %924 = vrot.lane.b32.xlu0 %v920, 8
    %v925 = vpop.permute.xlu0 %924
    %v926 = vsel %vm921, %v923, 0.0
    %v927 = vsel %vm921, %v925, 0.0
    %v928 = vsel %vm921, %v919, 0.0
    %v929 = vsel %vm921, %v920, 0.0
    %v930 = vpack.c.bf16 %v927, %v926
    %v931 = vpack.c.bf16 %v929, %v928
    %v932 = vld [vmem:[%s0 + $0x58] sm:$0xf]
    %v933 = vld [vmem:[%s0 + $0x5c] sm:$0xf]
    %v934 = vld [vmem:[%s0 + $0x60] sm:$0xf]
    %v935 = vld [vmem:[%s0 + $0x64] sm:$0xf]
    %v940 = vunpack.c.l.b16 %v932
    %v941 = vunpack.c.l.b16 %v933
    %v942 = vunpack.c.l.b16 %v934
    %v943 = vunpack.c.l.b16 %v935
    %v944 = vpack.c.b16 %v941, %v940
    %v945 = vpack.c.b16 %v943, %v942
    %v947 = vsel %vm137, %v944, 0
    %v950 = vsel %vm137, %v945, 0
    %952 = vmatpush.bf16.msra.mxu0 0
    %953 = vmatpush.bf16.msra.mxu0 0
    %954 = vmatpush.bf16.msra.mxu0 0
    %955 = vmatpush.bf16.msra.mxu0 0
    %956 = vmatpush.bf16.msra.mxu0 0
    %957 = vmatpush.bf16.msra.mxu0 0
    %958 = vmatpush.bf16.msra.mxu0 %v931
    %959 = vmatpush.bf16.msra.mxu0 %v930
    %960 = vmatmul.bf16.gmra.mxu0 %v947
    %v961 = vpop.f32.mrf.mxu0
    %v962 = vadd.f32 0.0, %v961
    %v963 = vpop.f32.mrf.mxu0
    %v964 = vadd.f32 0.0, %v963
    %965 = vmatmul.bf16.gmra.mxu0 %v950
    %v966 = vpop.f32.mrf.mxu0
    %v967 = vadd.f32 0.0, %v966
    %v968 = vpop.f32.mrf.mxu0
    %v969 = vadd.f32 0.0, %v968
    %970 = vdwg.mxu0
    %v971 = vtanh.pop %v962
    %v972 = vtanh.pop %v964
    %v973 = vxor.u32 %v967, 2147483648
    %v974 = vxor.u32 %v969, 2147483648
    %v975 = vmul.f32 %v973, 1.442695
    %v976 = vpow.pop %v975
    %v977 = vmul.f32 %v974, 1.442695
    %v978 = vpow.pop %v977
    %v979 = vadd.f32 %v976, 1.0
    %v980 = vadd.f32 %v978, 1.0
    %v981 = vrcp.pop %v979
    %v982 = vmul.f32 %v979, %v981
    %v983 = vsub.f32 1.0, %v982
    %v984 = vmul.f32 %v981, %v983
    %v985 = vadd.f32 %v981, %v984
    %vm986 = vweird.f32 %v979
    %vm987 = vweird.f32 %v981
    %vm988 = vmor %vm986, %vm987
    %v989 = vsel %vm988, %v981, %v985
    %v990 = vand.u32 2147483647, %v979
    %vm991 = vcmp.eq.f32.partialorder %v990, 8.507059e+37
    %v992 = vand.u32 %v979, 2147483648
    %v993 = vor.u32 1.1754944e-38, %v992
    %v994 = vsel %vm991, %v993, %v989
    %v995 = vmul.f32 1.0, %v994
    %v996 = vrcp.pop %v980
    %v997 = vmul.f32 %v980, %v996
    %v998 = vsub.f32 1.0, %v997
    %v999 = vmul.f32 %v996, %v998
    %v1000 = vadd.f32 %v996, %v999
    %vm1001 = vweird.f32 %v980
    %vm1002 = vweird.f32 %v996
    %vm1003 = vmor %vm1001, %vm1002
    %v1004 = vsel %vm1003, %v996, %v1000
    %v1005 = vand.u32 2147483647, %v980
    %vm1006 = vcmp.eq.f32.partialorder %v1005, 8.507059e+37
    %v1007 = vand.u32 %v980, 2147483648
    %v1008 = vor.u32 1.1754944e-38, %v1007
    %v1009 = vsel %vm1006, %v1008, %v1004
    %v1010 = vmul.f32 1.0, %v1009
    %v1011 = vmul.f32 %v971, %v995
    %v1012 = vmul.f32 %v972, %v1010
    %v1013 = vld [vmem:[%s0 + $0xe0] sm:$0xf]
    %v1014 = vld [vmem:[%s0 + $0xe4] sm:$0xf]
    %v1015 = vld [vmem:[%s0 + $0xe8] sm:$0xf]
    %v1016 = vld [vmem:[%s0 + $0xec] sm:$0xf]
    %v1017 = vld [vmem:[%s0 + $0xf0] sm:$0xf]
    %v1018 = vld [vmem:[%s0 + $0xf4] sm:$0xf]
    %v1019 = vpack.c.bf16 %v1012, %v1011
    %v1026 = vunpack.c.l.b16 %v1013
    %v1027 = vunpack.c.l.b16 %v1014
    %v1028 = vunpack.c.l.b16 %v1015
    %v1029 = vunpack.c.l.b16 %v1016
    %v1030 = vunpack.c.l.b16 %v1017
    %v1031 = vunpack.c.l.b16 %v1018
    %v1032 = vpack.c.b16 %v1027, %v1026
    %v1033 = vpack.c.b16 %v1029, %v1028
    %v1034 = vpack.c.b16 %v1031, %v1030
    %v1036 = vsel %vm269, %v1032, 0
    %v1039 = vsel %vm269, %v1033, 0
    %v1042 = vsel %vm269, %v1034, 0
    %1044 = vmatpush.bf16.msra.mxu0 0
    %1045 = vmatpush.bf16.msra.mxu0 0
    %1046 = vmatpush.bf16.msra.mxu0 0
    %1047 = vmatpush.bf16.msra.mxu0 0
    %1048 = vmatpush.bf16.msra.mxu0 0
    %1049 = vmatpush.bf16.msra.mxu0 0
    %1050 = vmatpush.bf16.msra.mxu0 0
    %1051 = vmatpush.bf16.msra.mxu0 %v1019
    %1052 = vmatmul.bf16.gmra.mxu0 %v1036
    %v1053 = vpop.f32.mrf.mxu0
    %v1054 = vadd.f32 0.0, %v1053
    %v1055 = vpop.f32.mrf.mxu0
    %v1056 = vadd.f32 0.0, %v1055
    %1057 = vmatmul.bf16.gmra.mxu0 %v1039
    %v1058 = vpop.f32.mrf.mxu0
    %v1059 = vadd.f32 0.0, %v1058
    %v1060 = vpop.f32.mrf.mxu0
    %v1061 = vadd.f32 0.0, %v1060
    %1062 = vmatmul.bf16.gmra.mxu0 %v1042
    %v1063 = vpop.f32.mrf.mxu0
    %v1064 = vpop.f32.mrf.mxu0
    %1065 = vdwg.mxu0
    %v1066 = vadd.f32 %v915, %v1054
    %v1067 = vadd.f32 %v916, %v1056
    %v1068 = vadd.f32 %v917, %v1059
    %v1069 = vadd.f32 %v918, %v1061
    %v1070 = vmax.f32 %v1066, 0.0
    %v1071 = vmax.f32 %v1067, 0.0
    %v1072 = vmax.f32 %v1068, 0.0
    %v1073 = vmax.f32 %v1069, 0.0
    %v1074 = vld [vmem:[%s0 + $0xf8] sm:$0xf]
    %v1075 = vld [vmem:[%s0 + $0xfc] sm:$0xf]
    %v1076 = vld [vmem:[%s0 + $0x100] sm:$0xf]
    %v1077 = vld [vmem:[%s0 + $0x104] sm:$0xf]
    %v1078 = vpack.c.bf16 %v1071, %v1070
    %v1079 = vpack.c.bf16 %v1073, %v1072
    %v1080 = vld [vmem:[%s0 + $0x118] sm:$0xf]
    %v1081 = vld [vmem:[%s0 + $0x11c] sm:$0xf]
    %v1082 = vld [vmem:[%s0 + $0x120] sm:$0xf]
    %v1083 = vld [vmem:[%s0 + $0x124] sm:$0xf]
    %v1084 = vunpack.c.l.bf16 %v1080
    %v1085 = vunpack.c.l.bf16 %v1081
    %v1086 = vunpack.c.l.bf16 %v1082
    %v1087 = vunpack.c.l.bf16 %v1083
    %1089 = vset.pattern.permute.xlu0 0
    %1090 = vperm.xlu0 %1089, %v1084
    %v1091 = vpop.permute.xlu0 %1090
    %1094 = vset.pattern.permute.xlu0 0
    %1095 = vperm.xlu0 %1094, %v1085
    %v1096 = vpop.permute.xlu0 %1095
    %1099 = vset.pattern.permute.xlu0 0
    %1100 = vperm.xlu0 %1099, %v1086
    %v1101 = vpop.permute.xlu0 %1100
    %1104 = vset.pattern.permute.xlu0 0
    %1105 = vperm.xlu0 %1104, %v1087
    %v1106 = vpop.permute.xlu0 %1105
    %v1112 = vunpack.c.l.b16 %v1074
    %v1113 = vunpack.c.l.b16 %v1075
    %v1114 = vunpack.c.l.b16 %v1076
    %v1115 = vunpack.c.l.b16 %v1077
    %v1116 = vpack.c.b16 %v1113, %v1112
    %v1117 = vpack.c.b16 %v1115, %v1114
    %v1119 = vsel %vm137, %v1116, 0
    %v1122 = vsel %vm137, %v1117, 0
    %1124 = vmatpush.bf16.msra.mxu0 0
    %1125 = vmatpush.bf16.msra.mxu0 0
    %1126 = vmatpush.bf16.msra.mxu0 0
    %1127 = vmatpush.bf16.msra.mxu0 0
    %1128 = vmatpush.bf16.msra.mxu0 0
    %1129 = vmatpush.bf16.msra.mxu0 0
    %1130 = vmatpush.bf16.msra.mxu0 %v1079
    %1131 = vmatpush.bf16.msra.mxu0 %v1078
    %1132 = vmatmul.bf16.gmra.mxu0 %v1119
    %v1133 = vpop.f32.mrf.mxu0
    %v1134 = vadd.f32 %v1091, %v1133
    %v1135 = vpop.f32.mrf.mxu0
    %v1136 = vadd.f32 %v1096, %v1135
    %1137 = vmatmul.bf16.gmra.mxu0 %v1122
    %v1138 = vpop.f32.mrf.mxu0
    %v1139 = vadd.f32 %v1101, %v1138
    %v1140 = vpop.f32.mrf.mxu0
    %v1141 = vadd.f32 %v1106, %v1140
    %1142 = vdwg.mxu0
    %v1143 = vmax.f32 %v1134, 0.0
    %v1144 = vmax.f32 %v1136, 0.0
    %v1145 = vmax.f32 %v1139, 0.0
    %v1146 = vmax.f32 %v1141, 0.0
    %v1147 = vld [vmem:[%s0 + $0x108] sm:$0xf]
    %v1148 = vld [vmem:[%s0 + $0x10c] sm:$0xf]
    %v1149 = vld [vmem:[%s0 + $0x110] sm:$0xf]
    %v1150 = vld [vmem:[%s0 + $0x114] sm:$0xf]
    %v1151 = vpack.c.bf16 %v1144, %v1143
    %v1152 = vpack.c.bf16 %v1146, %v1145
    %v1153 = vld [vmem:[%s0 + $0x128] sm:$0xf]
    %v1154 = vld [vmem:[%s0 + $0x12c] sm:$0xf]
    %v1155 = vld [vmem:[%s0 + $0x130] sm:$0xf]
    %v1156 = vld [vmem:[%s0 + $0x134] sm:$0xf]
    %v1157 = vunpack.c.l.bf16 %v1153
    %v1158 = vunpack.c.l.bf16 %v1154
    %v1159 = vunpack.c.l.bf16 %v1155
    %v1160 = vunpack.c.l.bf16 %v1156
    %1162 = vset.pattern.permute.xlu0 0
    %1163 = vperm.xlu0 %1162, %v1157
    %v1164 = vpop.permute.xlu0 %1163
    %1167 = vset.pattern.permute.xlu0 0
    %1168 = vperm.xlu0 %1167, %v1158
    %v1169 = vpop.permute.xlu0 %1168
    %1172 = vset.pattern.permute.xlu0 0
    %1173 = vperm.xlu0 %1172, %v1159
    %v1174 = vpop.permute.xlu0 %1173
    %1177 = vset.pattern.permute.xlu0 0
    %1178 = vperm.xlu0 %1177, %v1160
    %v1179 = vpop.permute.xlu0 %1178
    %v1185 = vunpack.c.l.b16 %v1147
    %v1186 = vunpack.c.l.b16 %v1148
    %v1187 = vunpack.c.l.b16 %v1149
    %v1188 = vunpack.c.l.b16 %v1150
    %v1189 = vpack.c.b16 %v1186, %v1185
    %v1190 = vpack.c.b16 %v1188, %v1187
    %v1192 = vsel %vm137, %v1189, 0
    %v1195 = vsel %vm137, %v1190, 0
    %1197 = vmatpush.bf16.msra.mxu0 0
    %1198 = vmatpush.bf16.msra.mxu0 0
    %1199 = vmatpush.bf16.msra.mxu0 0
    %1200 = vmatpush.bf16.msra.mxu0 0
    %1201 = vmatpush.bf16.msra.mxu0 0
    %1202 = vmatpush.bf16.msra.mxu0 0
    %1203 = vmatpush.bf16.msra.mxu0 %v1152
    %1204 = vmatpush.bf16.msra.mxu0 %v1151
    %1205 = vmatmul.bf16.gmra.mxu0 %v1192
    %v1206 = vpop.f32.mrf.mxu0
    %v1207 = vadd.f32 %v1164, %v1206
    %v1208 = vpop.f32.mrf.mxu0
    %v1209 = vadd.f32 %v1169, %v1208
    %1210 = vmatmul.bf16.gmra.mxu0 %v1195
    %v1211 = vpop.f32.mrf.mxu0
    %v1212 = vadd.f32 %v1174, %v1211
    %v1213 = vpop.f32.mrf.mxu0
    %v1214 = vadd.f32 %v1179, %v1213
    %1215 = vdwg.mxu0
    %1216 = vst [vmem:[%s3] sm:$0xff] %v1207
    %1217 = vst [vmem:[%s3 + $0x8] sm:$0xff] %v1209
    %1218 = vst [vmem:[%s3 + $0x10] sm:$0xff] %v1212
    %1219 = vst [vmem:[%s3 + $0x18] sm:$0xff] %v1214
    // Predicated region
    $region10: #{wavenet_forward_pallas.2} parent=1 // pred_check
      _
    $region11: #{wavenet_forward_pallas.2} parent=1 // pred_check_branch
      %1221 = sbr.rel (0) target = $region13
    $region12: #{wavenet_forward_pallas.2} parent=1 // pred_region
      _
    $region13: #{wavenet_forward_pallas.2} parent=1 // pred_fallthru
      _
    // Predicated region
    $region14: #{wavenet_forward_pallas.2} parent=1 // pred_check
      _
    $region15: #{wavenet_forward_pallas.2} parent=1 // pred_check_branch
      %1223 = sbr.rel (0) target = $region17
    $region16: #{wavenet_forward_pallas.2} parent=1 // pred_region
      _
    $region17: #{wavenet_forward_pallas.2} parent=1 // pred_fallthru
      _

</llo_original>
